<compile_context>
chip_gen: v5e
topology: v5e:2x2
jax: 0.10.0
libtpu: 0.0.40
codegen_flags: <defaults>
</compile_context>

<pallas_src>
import functools

import jax
import jax.numpy as jnp
from jax import lax
from jax.experimental import pallas as pl
from jax.experimental.pallas import tpu as pltpu


_TIME_UNROLL = 8  # timesteps fused per unroll group / output store


# ---------------------------------------------------------------------------
# Pallas kernel: one GRU layer, one direction per grid step
# ---------------------------------------------------------------------------
def _gru_layer_dir_kernel(x_ref, wih_ref, whh_ref, bih_ref, bhh_ref,
                          o_ref, gi_ref, *, seq_len, batch):
    """x_ref:   (T*B, Hin)  time-major (rows t*B .. t*B+B-1 = timestep t)
       wih_ref: (Hin, 3H)   gate order r | z | n
       whh_ref: (H,   3H)
       bih_ref: (1,   3H)
       bhh_ref: (1,   3H)
       o_ref:   (T*B, H)    all hidden states, same time order as input
       gi_ref:  (T*B, 3H)   VMEM scratch for the hoisted input projection."""
    T, B = seq_len, batch
    H = whh_ref.shape[0]

    # (1) Hoisted input projection: a single big MXU GEMM, out of the loop.
    gi_ref[...] = (
        jnp.dot(x_ref[...], wih_ref[...], preferred_element_type=jnp.float32)
        + bih_ref[...]
    )

    whh = whh_ref[...]
    bhh = bhh_ref[...]

    # (2) Recurrence: h lives in vregs; unrolled; chunked output stores.
    h = jnp.zeros((B, H), dtype=jnp.float32)
    for c0 in range(0, T, _TIME_UNROLL):
        clen = min(_TIME_UNROLL, T - c0)
        hs = []
        for tt in range(clen):
            t = c0 + tt
            gi_t = gi_ref[t * B:(t + 1) * B, :]                       # (B, 3H)
            gh = jnp.dot(h, whh, preferred_element_type=jnp.float32) + bhh
            r = jax.nn.sigmoid(gi_t[:, 0:H] + gh[:, 0:H])
            z = jax.nn.sigmoid(gi_t[:, H:2 * H] + gh[:, H:2 * H])
            n = jnp.tanh(gi_t[:, 2 * H:3 * H] + r * gh[:, 2 * H:3 * H])
            h = (1.0 - z) * n + z * h
            hs.append(h)
        o_ref[c0 * B:(c0 + clen) * B, :] = jnp.concatenate(hs, axis=0)


def _gru_layer_bidir(x_dir, wih, whh, bih, bhh, *, seq_len, batch):
    """x_dir: (2, T*B, Hin)  dir 0 = forward stream, dir 1 = time-reversed.
       Weights stacked per direction on axis 0.  Returns (2, T*B, H)."""
    _, TB, Hin = x_dir.shape
    H = whh.shape[1]
    kernel = functools.partial(_gru_layer_dir_kernel,
                               seq_len=seq_len, batch=batch)
    return pl.pallas_call(
        kernel,
        out_shape=jax.ShapeDtypeStruct((2, TB, H), jnp.float32),
        grid=(2,),
        in_specs=[
            pl.BlockSpec((None, TB, Hin), lambda d: (d, 0, 0)),
            pl.BlockSpec((None, Hin, 3 * H), lambda d: (d, 0, 0)),
            pl.BlockSpec((None, H, 3 * H), lambda d: (d, 0, 0)),
            pl.BlockSpec((None, 1, 3 * H), lambda d: (d, 0, 0)),
            pl.BlockSpec((None, 1, 3 * H), lambda d: (d, 0, 0)),
        ],
        out_specs=pl.BlockSpec((None, TB, H), lambda d: (d, 0, 0)),
        scratch_shapes=[pltpu.VMEM((TB, 3 * H), jnp.float32)],
        compiler_params=pltpu.CompilerParams(
            dimension_semantics=("parallel",)),   # 1 direction per TC on v7x
    )(x_dir, wih, whh, bih, bhh)


# ---------------------------------------------------------------------------
# BiDIRAR module
# ---------------------------------------------------------------------------
def _uniform(key, shape, bound):
    return jax.random.uniform(key, shape, jnp.float32, -bound, bound)


class BiDIRARPallas:
    """Bidirectional AR module: two independent stacked GRUs (fwd / bwd)."""

    def __init__(self, key, dimEncoded, dimOutput, nLevelsGRU):
        assert dimOutput % 2 == 0
        self.dimEncoded = dimEncoded
        self.dimOutput = dimOutput
        self.nLevelsGRU = nLevelsGRU
        H = dimOutput // 2
        self.H = H
        bound = 1.0 / float(H) ** 0.5   # PyTorch GRU init U(-1/sqrt(H), 1/sqrt(H))
        keys = jax.random.split(key, 8 * nLevelsGRU)
        self.layers = []
        for l in range(nLevelsGRU):
            in_dim = dimEncoded if l == 0 else H
            k = keys[8 * l:8 * (l + 1)]
            # axis 0: direction (0 = netForward, 1 = netBackward); stored (in, 3H)
            wih = jnp.stack([_uniform(k[0], (in_dim, 3 * H), bound),
                             _uniform(k[1], (in_dim, 3 * H), bound)], axis=0)
            whh = jnp.stack([_uniform(k[2], (H, 3 * H), bound),
                             _uniform(k[3], (H, 3 * H), bound)], axis=0)
            bih = jnp.stack([_uniform(k[4], (1, 3 * H), bound),
                             _uniform(k[5], (1, 3 * H), bound)], axis=0)
            bhh = jnp.stack([_uniform(k[6], (1, 3 * H), bound),
                             _uniform(k[7], (1, 3 * H), bound)], axis=0)
            self.layers.append((wih, whh, bih, bhh))

    def getDimOutput(self):
        return self.H * 2

    def forward(self, x):
        """x: (B, T, dimEncoded) -> (B, T, dimOutput)."""
        B, T, C = x.shape
        # flatten_parameters(): cuDNN-only layout hint, no-op in JAX.
        x_tb = x.transpose(1, 0, 2)                       # (T, B, C) time-major
        cur = jnp.stack([x_tb, x_tb[::-1]], axis=0)       # dir 1 = flip(x, time)
        cur = cur.reshape(2, T * B, C)
        for (wih, whh, bih, bhh) in self.layers:
            cur = _gru_layer_bidir(cur, wih, whh, bih, bhh, seq_len=T, batch=B)
        out = cur.reshape(2, T, B, self.H).transpose(0, 2, 1, 3)   # (2, B, T, H)
        xf = out[0]
        xb = out[1][:, ::-1, :]                           # flip backward stream back
        return jnp.concatenate([xf, xb], axis=2)          # (B, T, 2H)


# ---------------------------------------------------------------------------
# Pure-JAX reference (for a sanity check in __main__)
# ---------------------------------------------------------------------------
def _gru_stack_ref(x, layer_params, direction, H):
    def layer(x_in, wih, whh, bih, bhh):
        def step(h, x_t):
            gi = x_t @ wih + bih
            gh = h @ whh + bhh
            r = jax.nn.sigmoid(gi[:, :H] + gh[:, :H])
            z = jax.nn.sigmoid(gi[:, H:2 * H] + gh[:, H:2 * H])
            n = jnp.tanh(gi[:, 2 * H:] + r * gh[:, 2 * H:])
            h = (1.0 - z) * n + z * h
            return h, h
        h0 = jnp.zeros((x_in.shape[0], H), jnp.float32)
        _, ys = lax.scan(step, h0, x_in.transpose(1, 0, 2))
        return ys.transpose(1, 0, 2)

    cur = x
    for (wih, whh, bih, bhh) in layer_params:
        cur = layer(cur, wih[direction], whh[direction],
                    bih[direction, 0], bhh[direction, 0])
    return cur


def bidir_ar_ref(x, layers, H):
    xf = _gru_stack_ref(x, layers, 0, H)
    xb = jnp.flip(_gru_stack_ref(jnp.flip(x, 1), layers, 1, H), 1)
    return jnp.concatenate([xf, xb], axis=2)


if __name__ == "__main__":
    key = jax.random.PRNGKey(0)
    k_x, k_par = jax.random.split(key)
    B, T = 2, 8
    dimEncoded, dimOutput, nLevelsGRU = 32, 64, 2

    x = jax.random.normal(k_x, (B, T, dimEncoded), dtype=jnp.float32)
    model = BiDIRARPallas(k_par, dimEncoded, dimOutput, nLevelsGRU)

    out = jax.jit(model.forward)(x)
    jax.block_until_ready(out)

    assert out.shape == (B, T, dimOutput), out.shape
    assert bool(jnp.all(jnp.isfinite(out)))

    with jax.default_matmul_precision("float32"):
        ref = bidir_ar_ref(x, model.layers, model.H)
    err = float(jnp.max(jnp.abs(out - ref)))
    assert err < 5e-2, f"max abs err vs reference: {err}"

    print("KERNEL_OK")
</pallas_src>

<mosaic_0001>
module attributes {stable_mosaic.version = 11 : i64} {
  func.func @_gru_layer_dir_kernel(%arg0: i32, %arg1: memref<1x16x32xf32, #tpu.memory_space<vmem>>, %arg2: memref<1x32x96xf32, #tpu.memory_space<vmem>>, %arg3: memref<1x32x96xf32, #tpu.memory_space<vmem>>, %arg4: memref<1x1x96xf32, #tpu.memory_space<vmem>>, %arg5: memref<1x1x96xf32, #tpu.memory_space<vmem>>, %arg6: memref<1x16x32xf32, #tpu.memory_space<vmem>>, %arg7: memref<16x96xf32, #tpu.memory_space<vmem>>) attributes {dimension_semantics = [#tpu.dimension_semantics<parallel>], iteration_bounds = array<i64: 2>, scalar_prefetch = 0 : i64, scratch_operands = 1 : i64, tpu.core_type = #tpu.core_type<tc>, window_params = [{transform_indices = @transform_0, window_bounds = array<i64: 1, 16, 32>}, {transform_indices = @transform_1, window_bounds = array<i64: 1, 32, 96>}, {transform_indices = @transform_2, window_bounds = array<i64: 1, 32, 96>}, {transform_indices = @transform_3, window_bounds = array<i64: 1, 1, 96>}, {transform_indices = @transform_4, window_bounds = array<i64: 1, 1, 96>}, {transform_indices = @transform_5, window_bounds = array<i64: 1, 16, 32>}]} {
    %c0 = arith.constant 0 : index
    %c0_0 = arith.constant 0 : index
    %c0_1 = arith.constant 0 : index
    %0 = vector.load %arg1[%c0, %c0_0, %c0_1] : memref<1x16x32xf32, #tpu.memory_space<vmem>>, vector<1x16x32xf32>
    %1 = vector.shape_cast %0 : vector<1x16x32xf32> to vector<16x32xf32>
    %c0_2 = arith.constant 0 : index
    %c0_3 = arith.constant 0 : index
    %c0_4 = arith.constant 0 : index
    %2 = vector.load %arg2[%c0_2, %c0_3, %c0_4] : memref<1x32x96xf32, #tpu.memory_space<vmem>>, vector<1x32x96xf32>
    %3 = vector.shape_cast %2 : vector<1x32x96xf32> to vector<32x96xf32>
    %cst = arith.constant dense<0.000000e+00> : vector<16x96xf32>
    %4 = tpu.matmul %1, %3, %cst {dimension_numbers = #tpu.dot_dimension_numbers<[1], [0], [0], [1], [0, 0, 1, 1], [], []>} : vector<16x32xf32>, vector<32x96xf32>, vector<16x96xf32> -> vector<16x96xf32>
    %c0_5 = arith.constant 0 : index
    %c0_6 = arith.constant 0 : index
    %c0_7 = arith.constant 0 : index
    %5 = vector.load %arg4[%c0_5, %c0_6, %c0_7] : memref<1x1x96xf32, #tpu.memory_space<vmem>>, vector<1x1x96xf32>
    %6 = vector.shape_cast %5 : vector<1x1x96xf32> to vector<1x96xf32>
    %7 = vector.broadcast %6 : vector<1x96xf32> to vector<16x96xf32>
    %8 = arith.addf %4, %7 : vector<16x96xf32>
    %c0_8 = arith.constant 0 : index
    %c0_9 = arith.constant 0 : index
    %9 = vector.load %arg7[%c0_8, %c0_9] : memref<16x96xf32, #tpu.memory_space<vmem>>, vector<16x96xf32>
    tpu.vector_store %arg7[%c0_8, %c0_9], %8 {strides = array<i32>} : memref<16x96xf32, #tpu.memory_space<vmem>>, vector<16x96xf32>,
    %c0_10 = arith.constant 0 : index
    %c0_11 = arith.constant 0 : index
    %c0_12 = arith.constant 0 : index
    %10 = vector.load %arg3[%c0_10, %c0_11, %c0_12] : memref<1x32x96xf32, #tpu.memory_space<vmem>>, vector<1x32x96xf32>
    %11 = vector.shape_cast %10 : vector<1x32x96xf32> to vector<32x96xf32>
    %c0_13 = arith.constant 0 : index
    %c0_14 = arith.constant 0 : index
    %c0_15 = arith.constant 0 : index
    %12 = vector.load %arg5[%c0_13, %c0_14, %c0_15] : memref<1x1x96xf32, #tpu.memory_space<vmem>>, vector<1x1x96xf32>
    %13 = vector.shape_cast %12 : vector<1x1x96xf32> to vector<1x96xf32>
    %cst_16 = arith.constant 0.000000e+00 : f32
    %14 = vector.broadcast %cst_16 : f32 to vector<2x32xf32>
    %c0_17 = arith.constant 0 : index
    %c0_18 = arith.constant 0 : index
    %15 = vector.load %arg7[%c0_17, %c0_18] : memref<16x96xf32, #tpu.memory_space<vmem>>, vector<2x96xf32>
    %cst_19 = arith.constant dense<0.000000e+00> : vector<2x96xf32>
    %16 = tpu.matmul %14, %11, %cst_19 {dimension_numbers = #tpu.dot_dimension_numbers<[1], [0], [0], [1], [0, 0, 1, 1], [], []>} : vector<2x32xf32>, vector<32x96xf32>, vector<2x96xf32> -> vector<2x96xf32>
    %17 = vector.broadcast %13 : vector<1x96xf32> to vector<2x96xf32>
    %18 = arith.addf %16, %17 : vector<2x96xf32>
    %19 = vector.extract_strided_slice %15 {offsets = [0, 0], sizes = [2, 32], strides = [1, 1]} : vector<2x96xf32> to vector<2x32xf32>
    %20 = vector.extract_strided_slice %18 {offsets = [0, 0], sizes = [2, 32], strides = [1, 1]} : vector<2x96xf32> to vector<2x32xf32>
    %21 = arith.addf %19, %20 : vector<2x32xf32>
    %22 = arith.negf %21 : vector<2x32xf32>
    %23 = math.exp %22 : vector<2x32xf32>
    %cst_20 = arith.constant 1.000000e+00 : f32
    %24 = vector.broadcast %cst_20 : f32 to vector<2x32xf32>
    %25 = arith.addf %24, %23 : vector<2x32xf32>
    %26 = arith.divf %24, %25 : vector<2x32xf32>
    %27 = vector.extract_strided_slice %15 {offsets = [0, 32], sizes = [2, 32], strides = [1, 1]} : vector<2x96xf32> to vector<2x32xf32>
    %28 = vector.extract_strided_slice %18 {offsets = [0, 32], sizes = [2, 32], strides = [1, 1]} : vector<2x96xf32> to vector<2x32xf32>
    %29 = arith.addf %27, %28 : vector<2x32xf32>
    %30 = arith.negf %29 : vector<2x32xf32>
    %31 = math.exp %30 : vector<2x32xf32>
    %cst_21 = arith.constant 1.000000e+00 : f32
    %32 = vector.broadcast %cst_21 : f32 to vector<2x32xf32>
    %33 = arith.addf %32, %31 : vector<2x32xf32>
    %34 = arith.divf %32, %33 : vector<2x32xf32>
    %35 = vector.extract_strided_slice %15 {offsets = [0, 64], sizes = [2, 32], strides = [1, 1]} : vector<2x96xf32> to vector<2x32xf32>
    %36 = vector.extract_strided_slice %18 {offsets = [0, 64], sizes = [2, 32], strides = [1, 1]} : vector<2x96xf32> to vector<2x32xf32>
    %37 = arith.mulf %26, %36 : vector<2x32xf32>
    %38 = arith.addf %35, %37 : vector<2x32xf32>
    %39 = math.tanh %38 : vector<2x32xf32>
    %cst_22 = arith.constant 1.000000e+00 : f32
    %40 = vector.broadcast %cst_22 : f32 to vector<2x32xf32>
    %41 = arith.subf %40, %34 : vector<2x32xf32>
    %42 = arith.mulf %41, %39 : vector<2x32xf32>
    %43 = arith.mulf %34, %14 : vector<2x32xf32>
    %44 = arith.addf %42, %43 : vector<2x32xf32>
    %c2 = arith.constant 2 : index
    %c0_23 = arith.constant 0 : index
    %45 = vector.load %arg7[%c2, %c0_23] : memref<16x96xf32, #tpu.memory_space<vmem>>, vector<2x96xf32>
    %cst_24 = arith.constant dense<0.000000e+00> : vector<2x96xf32>
    %46 = tpu.matmul %44, %11, %cst_24 {dimension_numbers = #tpu.dot_dimension_numbers<[1], [0], [0], [1], [0, 0, 1, 1], [], []>} : vector<2x32xf32>, vector<32x96xf32>, vector<2x96xf32> -> vector<2x96xf32>
    %47 = vector.broadcast %13 : vector<1x96xf32> to vector<2x96xf32>
    %48 = arith.addf %46, %47 : vector<2x96xf32>
    %49 = vector.extract_strided_slice %45 {offsets = [0, 0], sizes = [2, 32], strides = [1, 1]} : vector<2x96xf32> to vector<2x32xf32>
    %50 = vector.extract_strided_slice %48 {offsets = [0, 0], sizes = [2, 32], strides = [1, 1]} : vector<2x96xf32> to vector<2x32xf32>
    %51 = arith.addf %49, %50 : vector<2x32xf32>
    %52 = arith.negf %51 : vector<2x32xf32>
    %53 = math.exp %52 : vector<2x32xf32>
    %cst_25 = arith.constant 1.000000e+00 : f32
    %54 = vector.broadcast %cst_25 : f32 to vector<2x32xf32>
    %55 = arith.addf %54, %53 : vector<2x32xf32>
    %56 = arith.divf %54, %55 : vector<2x32xf32>
    %57 = vector.extract_strided_slice %45 {offsets = [0, 32], sizes = [2, 32], strides = [1, 1]} : vector<2x96xf32> to vector<2x32xf32>
    %58 = vector.extract_strided_slice %48 {offsets = [0, 32], sizes = [2, 32], strides = [1, 1]} : vector<2x96xf32> to vector<2x32xf32>
    %59 = arith.addf %57, %58 : vector<2x32xf32>
    %60 = arith.negf %59 : vector<2x32xf32>
    %61 = math.exp %60 : vector<2x32xf32>
    %cst_26 = arith.constant 1.000000e+00 : f32
    %62 = vector.broadcast %cst_26 : f32 to vector<2x32xf32>
    %63 = arith.addf %62, %61 : vector<2x32xf32>
    %64 = arith.divf %62, %63 : vector<2x32xf32>
    %65 = vector.extract_strided_slice %45 {offsets = [0, 64], sizes = [2, 32], strides = [1, 1]} : vector<2x96xf32> to vector<2x32xf32>
    %66 = vector.extract_strided_slice %48 {offsets = [0, 64], sizes = [2, 32], strides = [1, 1]} : vector<2x96xf32> to vector<2x32xf32>
    %67 = arith.mulf %56, %66 : vector<2x32xf32>
    %68 = arith.addf %65, %67 : vector<2x32xf32>
    %69 = math.tanh %68 : vector<2x32xf32>
    %cst_27 = arith.constant 1.000000e+00 : f32
    %70 = vector.broadcast %cst_27 : f32 to vector<2x32xf32>
    %71 = arith.subf %70, %64 : vector<2x32xf32>
    %72 = arith.mulf %71, %69 : vector<2x32xf32>
    %73 = arith.mulf %64, %44 : vector<2x32xf32>
    %74 = arith.addf %72, %73 : vector<2x32xf32>
    %c4 = arith.constant 4 : index
    %c0_28 = arith.constant 0 : index
    %75 = vector.load %arg7[%c4, %c0_28] : memref<16x96xf32, #tpu.memory_space<vmem>>, vector<2x96xf32>
    %cst_29 = arith.constant dense<0.000000e+00> : vector<2x96xf32>
    %76 = tpu.matmul %74, %11, %cst_29 {dimension_numbers = #tpu.dot_dimension_numbers<[1], [0], [0], [1], [0, 0, 1, 1], [], []>} : vector<2x32xf32>, vector<32x96xf32>, vector<2x96xf32> -> vector<2x96xf32>
    %77 = vector.broadcast %13 : vector<1x96xf32> to vector<2x96xf32>
    %78 = arith.addf %76, %77 : vector<2x96xf32>
    %79 = vector.extract_strided_slice %75 {offsets = [0, 0], sizes = [2, 32], strides = [1, 1]} : vector<2x96xf32> to vector<2x32xf32>
    %80 = vector.extract_strided_slice %78 {offsets = [0, 0], sizes = [2, 32], strides = [1, 1]} : vector<2x96xf32> to vector<2x32xf32>
    %81 = arith.addf %79, %80 : vector<2x32xf32>
    %82 = arith.negf %81 : vector<2x32xf32>
    %83 = math.exp %82 : vector<2x32xf32>
    %cst_30 = arith.constant 1.000000e+00 : f32
    %84 = vector.broadcast %cst_30 : f32 to vector<2x32xf32>
    %85 = arith.addf %84, %83 : vector<2x32xf32>
    %86 = arith.divf %84, %85 : vector<2x32xf32>
    %87 = vector.extract_strided_slice %75 {offsets = [0, 32], sizes = [2, 32], strides = [1, 1]} : vector<2x96xf32> to vector<2x32xf32>
    %88 = vector.extract_strided_slice %78 {offsets = [0, 32], sizes = [2, 32], strides = [1, 1]} : vector<2x96xf32> to vector<2x32xf32>
    %89 = arith.addf %87, %88 : vector<2x32xf32>
    %90 = arith.negf %89 : vector<2x32xf32>
    %91 = math.exp %90 : vector<2x32xf32>
    %cst_31 = arith.constant 1.000000e+00 : f32
    %92 = vector.broadcast %cst_31 : f32 to vector<2x32xf32>
    %93 = arith.addf %92, %91 : vector<2x32xf32>
    %94 = arith.divf %92, %93 : vector<2x32xf32>
    %95 = vector.extract_strided_slice %75 {offsets = [0, 64], sizes = [2, 32], strides = [1, 1]} : vector<2x96xf32> to vector<2x32xf32>
    %96 = vector.extract_strided_slice %78 {offsets = [0, 64], sizes = [2, 32], strides = [1, 1]} : vector<2x96xf32> to vector<2x32xf32>
    %97 = arith.mulf %86, %96 : vector<2x32xf32>
    %98 = arith.addf %95, %97 : vector<2x32xf32>
    %99 = math.tanh %98 : vector<2x32xf32>
    %cst_32 = arith.constant 1.000000e+00 : f32
    %100 = vector.broadcast %cst_32 : f32 to vector<2x32xf32>
    %101 = arith.subf %100, %94 : vector<2x32xf32>
    %102 = arith.mulf %101, %99 : vector<2x32xf32>
    %103 = arith.mulf %94, %74 : vector<2x32xf32>
    %104 = arith.addf %102, %103 : vector<2x32xf32>
    %c6 = arith.constant 6 : index
    %c0_33 = arith.constant 0 : index
    %105 = vector.load %arg7[%c6, %c0_33] : memref<16x96xf32, #tpu.memory_space<vmem>>, vector<2x96xf32>
    %cst_34 = arith.constant dense<0.000000e+00> : vector<2x96xf32>
    %106 = tpu.matmul %104, %11, %cst_34 {dimension_numbers = #tpu.dot_dimension_numbers<[1], [0], [0], [1], [0, 0, 1, 1], [], []>} : vector<2x32xf32>, vector<32x96xf32>, vector<2x96xf32> -> vector<2x96xf32>
    %107 = vector.broadcast %13 : vector<1x96xf32> to vector<2x96xf32>
    %108 = arith.addf %106, %107 : vector<2x96xf32>
    %109 = vector.extract_strided_slice %105 {offsets = [0, 0], sizes = [2, 32], strides = [1, 1]} : vector<2x96xf32> to vector<2x32xf32>
    %110 = vector.extract_strided_slice %108 {offsets = [0, 0], sizes = [2, 32], strides = [1, 1]} : vector<2x96xf32> to vector<2x32xf32>
    %111 = arith.addf %109, %110 : vector<2x32xf32>
    %112 = arith.negf %111 : vector<2x32xf32>
    %113 = math.exp %112 : vector<2x32xf32>
    %cst_35 = arith.constant 1.000000e+00 : f32
    %114 = vector.broadcast %cst_35 : f32 to vector<2x32xf32>
    %115 = arith.addf %114, %113 : vector<2x32xf32>
    %116 = arith.divf %114, %115 : vector<2x32xf32>
    %117 = vector.extract_strided_slice %105 {offsets = [0, 32], sizes = [2, 32], strides = [1, 1]} : vector<2x96xf32> to vector<2x32xf32>
    %118 = vector.extract_strided_slice %108 {offsets = [0, 32], sizes = [2, 32], strides = [1, 1]} : vector<2x96xf32> to vector<2x32xf32>
    %119 = arith.addf %117, %118 : vector<2x32xf32>
    %120 = arith.negf %119 : vector<2x32xf32>
    %121 = math.exp %120 : vector<2x32xf32>
    %cst_36 = arith.constant 1.000000e+00 : f32
    %122 = vector.broadcast %cst_36 : f32 to vector<2x32xf32>
    %123 = arith.addf %122, %121 : vector<2x32xf32>
    %124 = arith.divf %122, %123 : vector<2x32xf32>
    %125 = vector.extract_strided_slice %105 {offsets = [0, 64], sizes = [2, 32], strides = [1, 1]} : vector<2x96xf32> to vector<2x32xf32>
    %126 = vector.extract_strided_slice %108 {offsets = [0, 64], sizes = [2, 32], strides = [1, 1]} : vector<2x96xf32> to vector<2x32xf32>
    %127 = arith.mulf %116, %126 : vector<2x32xf32>
    %128 = arith.addf %125, %127 : vector<2x32xf32>
    %129 = math.tanh %128 : vector<2x32xf32>
    %cst_37 = arith.constant 1.000000e+00 : f32
    %130 = vector.broadcast %cst_37 : f32 to vector<2x32xf32>
    %131 = arith.subf %130, %124 : vector<2x32xf32>
    %132 = arith.mulf %131, %129 : vector<2x32xf32>
    %133 = arith.mulf %124, %104 : vector<2x32xf32>
    %134 = arith.addf %132, %133 : vector<2x32xf32>
    %c8 = arith.constant 8 : index
    %c0_38 = arith.constant 0 : index
    %135 = vector.load %arg7[%c8, %c0_38] : memref<16x96xf32, #tpu.memory_space<vmem>>, vector<2x96xf32>
    %cst_39 = arith.constant dense<0.000000e+00> : vector<2x96xf32>
    %136 = tpu.matmul %134, %11, %cst_39 {dimension_numbers = #tpu.dot_dimension_numbers<[1], [0], [0], [1], [0, 0, 1, 1], [], []>} : vector<2x32xf32>, vector<32x96xf32>, vector<2x96xf32> -> vector<2x96xf32>
    %137 = vector.broadcast %13 : vector<1x96xf32> to vector<2x96xf32>
    %138 = arith.addf %136, %137 : vector<2x96xf32>
    %139 = vector.extract_strided_slice %135 {offsets = [0, 0], sizes = [2, 32], strides = [1, 1]} : vector<2x96xf32> to vector<2x32xf32>
    %140 = vector.extract_strided_slice %138 {offsets = [0, 0], sizes = [2, 32], strides = [1, 1]} : vector<2x96xf32> to vector<2x32xf32>
    %141 = arith.addf %139, %140 : vector<2x32xf32>
    %142 = arith.negf %141 : vector<2x32xf32>
    %143 = math.exp %142 : vector<2x32xf32>
    %cst_40 = arith.constant 1.000000e+00 : f32
    %144 = vector.broadcast %cst_40 : f32 to vector<2x32xf32>
    %145 = arith.addf %144, %143 : vector<2x32xf32>
    %146 = arith.divf %144, %145 : vector<2x32xf32>
    %147 = vector.extract_strided_slice %135 {offsets = [0, 32], sizes = [2, 32], strides = [1, 1]} : vector<2x96xf32> to vector<2x32xf32>
    %148 = vector.extract_strided_slice %138 {offsets = [0, 32], sizes = [2, 32], strides = [1, 1]} : vector<2x96xf32> to vector<2x32xf32>
    %149 = arith.addf %147, %148 : vector<2x32xf32>
    %150 = arith.negf %149 : vector<2x32xf32>
    %151 = math.exp %150 : vector<2x32xf32>
    %cst_41 = arith.constant 1.000000e+00 : f32
    %152 = vector.broadcast %cst_41 : f32 to vector<2x32xf32>
    %153 = arith.addf %152, %151 : vector<2x32xf32>
    %154 = arith.divf %152, %153 : vector<2x32xf32>
    %155 = vector.extract_strided_slice %135 {offsets = [0, 64], sizes = [2, 32], strides = [1, 1]} : vector<2x96xf32> to vector<2x32xf32>
    %156 = vector.extract_strided_slice %138 {offsets = [0, 64], sizes = [2, 32], strides = [1, 1]} : vector<2x96xf32> to vector<2x32xf32>
    %157 = arith.mulf %146, %156 : vector<2x32xf32>
    %158 = arith.addf %155, %157 : vector<2x32xf32>
    %159 = math.tanh %158 : vector<2x32xf32>
    %cst_42 = arith.constant 1.000000e+00 : f32
    %160 = vector.broadcast %cst_42 : f32 to vector<2x32xf32>
    %161 = arith.subf %160, %154 : vector<2x32xf32>
    %162 = arith.mulf %161, %159 : vector<2x32xf32>
    %163 = arith.mulf %154, %134 : vector<2x32xf32>
    %164 = arith.addf %162, %163 : vector<2x32xf32>
    %c10 = arith.constant 10 : index
    %c0_43 = arith.constant 0 : index
    %165 = vector.load %arg7[%c10, %c0_43] : memref<16x96xf32, #tpu.memory_space<vmem>>, vector<2x96xf32>
    %cst_44 = arith.constant dense<0.000000e+00> : vector<2x96xf32>
    %166 = tpu.matmul %164, %11, %cst_44 {dimension_numbers = #tpu.dot_dimension_numbers<[1], [0], [0], [1], [0, 0, 1, 1], [], []>} : vector<2x32xf32>, vector<32x96xf32>, vector<2x96xf32> -> vector<2x96xf32>
    %167 = vector.broadcast %13 : vector<1x96xf32> to vector<2x96xf32>
    %168 = arith.addf %166, %167 : vector<2x96xf32>
    %169 = vector.extract_strided_slice %165 {offsets = [0, 0], sizes = [2, 32], strides = [1, 1]} : vector<2x96xf32> to vector<2x32xf32>
    %170 = vector.extract_strided_slice %168 {offsets = [0, 0], sizes = [2, 32], strides = [1, 1]} : vector<2x96xf32> to vector<2x32xf32>
    %171 = arith.addf %169, %170 : vector<2x32xf32>
    %172 = arith.negf %171 : vector<2x32xf32>
    %173 = math.exp %172 : vector<2x32xf32>
    %cst_45 = arith.constant 1.000000e+00 : f32
    %174 = vector.broadcast %cst_45 : f32 to vector<2x32xf32>
    %175 = arith.addf %174, %173 : vector<2x32xf32>
    %176 = arith.divf %174, %175 : vector<2x32xf32>
    %177 = vector.extract_strided_slice %165 {offsets = [0, 32], sizes = [2, 32], strides = [1, 1]} : vector<2x96xf32> to vector<2x32xf32>
    %178 = vector.extract_strided_slice %168 {offsets = [0, 32], sizes = [2, 32], strides = [1, 1]} : vector<2x96xf32> to vector<2x32xf32>
    %179 = arith.addf %177, %178 : vector<2x32xf32>
    %180 = arith.negf %179 : vector<2x32xf32>
    %181 = math.exp %180 : vector<2x32xf32>
    %cst_46 = arith.constant 1.000000e+00 : f32
    %182 = vector.broadcast %cst_46 : f32 to vector<2x32xf32>
    %183 = arith.addf %182, %181 : vector<2x32xf32>
    %184 = arith.divf %182, %183 : vector<2x32xf32>
    %185 = vector.extract_strided_slice %165 {offsets = [0, 64], sizes = [2, 32], strides = [1, 1]} : vector<2x96xf32> to vector<2x32xf32>
    %186 = vector.extract_strided_slice %168 {offsets = [0, 64], sizes = [2, 32], strides = [1, 1]} : vector<2x96xf32> to vector<2x32xf32>
    %187 = arith.mulf %176, %186 : vector<2x32xf32>
    %188 = arith.addf %185, %187 : vector<2x32xf32>
    %189 = math.tanh %188 : vector<2x32xf32>
    %cst_47 = arith.constant 1.000000e+00 : f32
    %190 = vector.broadcast %cst_47 : f32 to vector<2x32xf32>
    %191 = arith.subf %190, %184 : vector<2x32xf32>
    %192 = arith.mulf %191, %189 : vector<2x32xf32>
    %193 = arith.mulf %184, %164 : vector<2x32xf32>
    %194 = arith.addf %192, %193 : vector<2x32xf32>
    %c12 = arith.constant 12 : index
    %c0_48 = arith.constant 0 : index
    %195 = vector.load %arg7[%c12, %c0_48] : memref<16x96xf32, #tpu.memory_space<vmem>>, vector<2x96xf32>
    %cst_49 = arith.constant dense<0.000000e+00> : vector<2x96xf32>
    %196 = tpu.matmul %194, %11, %cst_49 {dimension_numbers = #tpu.dot_dimension_numbers<[1], [0], [0], [1], [0, 0, 1, 1], [], []>} : vector<2x32xf32>, vector<32x96xf32>, vector<2x96xf32> -> vector<2x96xf32>
    %197 = vector.broadcast %13 : vector<1x96xf32> to vector<2x96xf32>
    %198 = arith.addf %196, %197 : vector<2x96xf32>
    %199 = vector.extract_strided_slice %195 {offsets = [0, 0], sizes = [2, 32], strides = [1, 1]} : vector<2x96xf32> to vector<2x32xf32>
    %200 = vector.extract_strided_slice %198 {offsets = [0, 0], sizes = [2, 32], strides = [1, 1]} : vector<2x96xf32> to vector<2x32xf32>
    %201 = arith.addf %199, %200 : vector<2x32xf32>
    %202 = arith.negf %201 : vector<2x32xf32>
    %203 = math.exp %202 : vector<2x32xf32>
    %cst_50 = arith.constant 1.000000e+00 : f32
    %204 = vector.broadcast %cst_50 : f32 to vector<2x32xf32>
    %205 = arith.addf %204, %203 : vector<2x32xf32>
    %206 = arith.divf %204, %205 : vector<2x32xf32>
    %207 = vector.extract_strided_slice %195 {offsets = [0, 32], sizes = [2, 32], strides = [1, 1]} : vector<2x96xf32> to vector<2x32xf32>
    %208 = vector.extract_strided_slice %198 {offsets = [0, 32], sizes = [2, 32], strides = [1, 1]} : vector<2x96xf32> to vector<2x32xf32>
    %209 = arith.addf %207, %208 : vector<2x32xf32>
    %210 = arith.negf %209 : vector<2x32xf32>
    %211 = math.exp %210 : vector<2x32xf32>
    %cst_51 = arith.constant 1.000000e+00 : f32
    %212 = vector.broadcast %cst_51 : f32 to vector<2x32xf32>
    %213 = arith.addf %212, %211 : vector<2x32xf32>
    %214 = arith.divf %212, %213 : vector<2x32xf32>
    %215 = vector.extract_strided_slice %195 {offsets = [0, 64], sizes = [2, 32], strides = [1, 1]} : vector<2x96xf32> to vector<2x32xf32>
    %216 = vector.extract_strided_slice %198 {offsets = [0, 64], sizes = [2, 32], strides = [1, 1]} : vector<2x96xf32> to vector<2x32xf32>
    %217 = arith.mulf %206, %216 : vector<2x32xf32>
    %218 = arith.addf %215, %217 : vector<2x32xf32>
    %219 = math.tanh %218 : vector<2x32xf32>
    %cst_52 = arith.constant 1.000000e+00 : f32
    %220 = vector.broadcast %cst_52 : f32 to vector<2x32xf32>
    %221 = arith.subf %220, %214 : vector<2x32xf32>
    %222 = arith.mulf %221, %219 : vector<2x32xf32>
    %223 = arith.mulf %214, %194 : vector<2x32xf32>
    %224 = arith.addf %222, %223 : vector<2x32xf32>
    %c14 = arith.constant 14 : index
    %c0_53 = arith.constant 0 : index
    %225 = vector.load %arg7[%c14, %c0_53] : memref<16x96xf32, #tpu.memory_space<vmem>>, vector<2x96xf32>
    %cst_54 = arith.constant dense<0.000000e+00> : vector<2x96xf32>
    %226 = tpu.matmul %224, %11, %cst_54 {dimension_numbers = #tpu.dot_dimension_numbers<[1], [0], [0], [1], [0, 0, 1, 1], [], []>} : vector<2x32xf32>, vector<32x96xf32>, vector<2x96xf32> -> vector<2x96xf32>
    %227 = vector.broadcast %13 : vector<1x96xf32> to vector<2x96xf32>
    %228 = arith.addf %226, %227 : vector<2x96xf32>
    %229 = vector.extract_strided_slice %225 {offsets = [0, 0], sizes = [2, 32], strides = [1, 1]} : vector<2x96xf32> to vector<2x32xf32>
    %230 = vector.extract_strided_slice %228 {offsets = [0, 0], sizes = [2, 32], strides = [1, 1]} : vector<2x96xf32> to vector<2x32xf32>
    %231 = arith.addf %229, %230 : vector<2x32xf32>
    %232 = arith.negf %231 : vector<2x32xf32>
    %233 = math.exp %232 : vector<2x32xf32>
    %cst_55 = arith.constant 1.000000e+00 : f32
    %234 = vector.broadcast %cst_55 : f32 to vector<2x32xf32>
    %235 = arith.addf %234, %233 : vector<2x32xf32>
    %236 = arith.divf %234, %235 : vector<2x32xf32>
    %237 = vector.extract_strided_slice %225 {offsets = [0, 32], sizes = [2, 32], strides = [1, 1]} : vector<2x96xf32> to vector<2x32xf32>
    %238 = vector.extract_strided_slice %228 {offsets = [0, 32], sizes = [2, 32], strides = [1, 1]} : vector<2x96xf32> to vector<2x32xf32>
    %239 = arith.addf %237, %238 : vector<2x32xf32>
    %240 = arith.negf %239 : vector<2x32xf32>
    %241 = math.exp %240 : vector<2x32xf32>
    %cst_56 = arith.constant 1.000000e+00 : f32
    %242 = vector.broadcast %cst_56 : f32 to vector<2x32xf32>
    %243 = arith.addf %242, %241 : vector<2x32xf32>
    %244 = arith.divf %242, %243 : vector<2x32xf32>
    %245 = vector.extract_strided_slice %225 {offsets = [0, 64], sizes = [2, 32], strides = [1, 1]} : vector<2x96xf32> to vector<2x32xf32>
    %246 = vector.extract_strided_slice %228 {offsets = [0, 64], sizes = [2, 32], strides = [1, 1]} : vector<2x96xf32> to vector<2x32xf32>
    %247 = arith.mulf %236, %246 : vector<2x32xf32>
    %248 = arith.addf %245, %247 : vector<2x32xf32>
    %249 = math.tanh %248 : vector<2x32xf32>
    %cst_57 = arith.constant 1.000000e+00 : f32
    %250 = vector.broadcast %cst_57 : f32 to vector<2x32xf32>
    %251 = arith.subf %250, %244 : vector<2x32xf32>
    %252 = arith.mulf %251, %249 : vector<2x32xf32>
    %253 = arith.mulf %244, %224 : vector<2x32xf32>
    %254 = arith.addf %252, %253 : vector<2x32xf32>
    %255 = tpu.concatenate %44, %74, %104, %134, %164, %194, %224, %254 in 0 : vector<2x32xf32>, vector<2x32xf32>, vector<2x32xf32>, vector<2x32xf32>, vector<2x32xf32>, vector<2x32xf32>, vector<2x32xf32>, vector<2x32xf32> -> vector<16x32xf32>
    %c0_58 = arith.constant 0 : index
    %c0_59 = arith.constant 0 : index
    %c0_60 = arith.constant 0 : index
    %256 = vector.load %arg6[%c0_58, %c0_59, %c0_60] : memref<1x16x32xf32, #tpu.memory_space<vmem>>, vector<1x16x32xf32>
    %257 = vector.shape_cast %256 : vector<1x16x32xf32> to vector<16x32xf32>
    %258 = vector.shape_cast %255 : vector<16x32xf32> to vector<1x16x32xf32>
    tpu.vector_store %arg6[%c0_58, %c0_59, %c0_60], %258 {strides = array<i32>} : memref<1x16x32xf32, #tpu.memory_space<vmem>>, vector<1x16x32xf32>,
    return
  }
  func.func @transform_0(%arg0: i32) -> (i32, i32, i32) {
    %c0_i32 = arith.constant 0 : i32
    %c0_i32_0 = arith.constant 0 : i32
    %c0_i32_1 = arith.constant 0 : i32
    return %arg0, %c0_i32, %c0_i32_0 : i32, i32, i32
  }
  func.func @transform_1(%arg0: i32) -> (i32, i32, i32) {
    %c0_i32 = arith.constant 0 : i32
    %c0_i32_0 = arith.constant 0 : i32
    %c0_i32_1 = arith.constant 0 : i32
    return %arg0, %c0_i32, %c0_i32_0 : i32, i32, i32
  }
  func.func @transform_2(%arg0: i32) -> (i32, i32, i32) {
    %c0_i32 = arith.constant 0 : i32
    %c0_i32_0 = arith.constant 0 : i32
    %c0_i32_1 = arith.constant 0 : i32
    return %arg0, %c0_i32, %c0_i32_0 : i32, i32, i32
  }
  func.func @transform_3(%arg0: i32) -> (i32, i32, i32) {
    %c0_i32 = arith.constant 0 : i32
    %c0_i32_0 = arith.constant 0 : i32
    %c0_i32_1 = arith.constant 0 : i32
    return %arg0, %c0_i32, %c0_i32_0 : i32, i32, i32
  }
  func.func @transform_4(%arg0: i32) -> (i32, i32, i32) {
    %c0_i32 = arith.constant 0 : i32
    %c0_i32_0 = arith.constant 0 : i32
    %c0_i32_1 = arith.constant 0 : i32
    return %arg0, %c0_i32, %c0_i32_0 : i32, i32, i32
  }
  func.func @transform_5(%arg0: i32) -> (i32, i32, i32) {
    %c0_i32 = arith.constant 0 : i32
    %c0_i32_0 = arith.constant 0 : i32
    %c0_i32_1 = arith.constant 0 : i32
    return %arg0, %c0_i32, %c0_i32_0 : i32, i32, i32
  }
}

module attributes {stable_mosaic.version = 11 : i64} {
  func.func @_gru_layer_dir_kernel(%arg0: i32, %arg1: memref<1x16x32xf32, #tpu.memory_space<vmem>>, %arg2: memref<1x32x96xf32, #tpu.memory_space<vmem>>, %arg3: memref<1x32x96xf32, #tpu.memory_space<vmem>>, %arg4: memref<1x1x96xf32, #tpu.memory_space<vmem>>, %arg5: memref<1x1x96xf32, #tpu.memory_space<vmem>>, %arg6: memref<1x16x32xf32, #tpu.memory_space<vmem>>, %arg7: memref<16x96xf32, #tpu.memory_space<vmem>>) attributes {dimension_semantics = [#tpu.dimension_semantics<parallel>], iteration_bounds = array<i64: 2>, scalar_prefetch = 0 : i64, scratch_operands = 1 : i64, tpu.core_type = #tpu.core_type<tc>, window_params = [{transform_indices = @transform_0, window_bounds = array<i64: 1, 16, 32>}, {transform_indices = @transform_1, window_bounds = array<i64: 1, 32, 96>}, {transform_indices = @transform_2, window_bounds = array<i64: 1, 32, 96>}, {transform_indices = @transform_3, window_bounds = array<i64: 1, 1, 96>}, {transform_indices = @transform_4, window_bounds = array<i64: 1, 1, 96>}, {transform_indices = @transform_5, window_bounds = array<i64: 1, 16, 32>}]} {
    %c0 = arith.constant 0 : index
    %c0_0 = arith.constant 0 : index
    %c0_1 = arith.constant 0 : index
    %0 = vector.load %arg1[%c0, %c0_0, %c0_1] : memref<1x16x32xf32, #tpu.memory_space<vmem>>, vector<1x16x32xf32>
    %1 = vector.shape_cast %0 : vector<1x16x32xf32> to vector<16x32xf32>
    %c0_2 = arith.constant 0 : index
    %c0_3 = arith.constant 0 : index
    %c0_4 = arith.constant 0 : index
    %2 = vector.load %arg2[%c0_2, %c0_3, %c0_4] : memref<1x32x96xf32, #tpu.memory_space<vmem>>, vector<1x32x96xf32>
    %3 = vector.shape_cast %2 : vector<1x32x96xf32> to vector<32x96xf32>
    %cst = arith.constant dense<0.000000e+00> : vector<16x96xf32>
    %4 = tpu.matmul %1, %3, %cst {dimension_numbers = #tpu.dot_dimension_numbers<[1], [0], [0], [1], [0, 0, 1, 1], [], []>} : vector<16x32xf32>, vector<32x96xf32>, vector<16x96xf32> -> vector<16x96xf32>
    %c0_5 = arith.constant 0 : index
    %c0_6 = arith.constant 0 : index
    %c0_7 = arith.constant 0 : index
    %5 = vector.load %arg4[%c0_5, %c0_6, %c0_7] : memref<1x1x96xf32, #tpu.memory_space<vmem>>, vector<1x1x96xf32>
    %6 = vector.shape_cast %5 : vector<1x1x96xf32> to vector<1x96xf32>
    %7 = vector.broadcast %6 : vector<1x96xf32> to vector<16x96xf32>
    %8 = arith.addf %4, %7 : vector<16x96xf32>
    %c0_8 = arith.constant 0 : index
    %c0_9 = arith.constant 0 : index
    %9 = vector.load %arg7[%c0_8, %c0_9] : memref<16x96xf32, #tpu.memory_space<vmem>>, vector<16x96xf32>
    tpu.vector_store %arg7[%c0_8, %c0_9], %8 {strides = array<i32>} : memref<16x96xf32, #tpu.memory_space<vmem>>, vector<16x96xf32>,
    %c0_10 = arith.constant 0 : index
    %c0_11 = arith.constant 0 : index
    %c0_12 = arith.constant 0 : index
    %10 = vector.load %arg3[%c0_10, %c0_11, %c0_12] : memref<1x32x96xf32, #tpu.memory_space<vmem>>, vector<1x32x96xf32>
    %11 = vector.shape_cast %10 : vector<1x32x96xf32> to vector<32x96xf32>
    %c0_13 = arith.constant 0 : index
    %c0_14 = arith.constant 0 : index
    %c0_15 = arith.constant 0 : index
    %12 = vector.load %arg5[%c0_13, %c0_14, %c0_15] : memref<1x1x96xf32, #tpu.memory_space<vmem>>, vector<1x1x96xf32>
    %13 = vector.shape_cast %12 : vector<1x1x96xf32> to vector<1x96xf32>
    %cst_16 = arith.constant 0.000000e+00 : f32
    %14 = vector.broadcast %cst_16 : f32 to vector<2x32xf32>
    %c0_17 = arith.constant 0 : index
    %c0_18 = arith.constant 0 : index
    %15 = vector.load %arg7[%c0_17, %c0_18] : memref<16x96xf32, #tpu.memory_space<vmem>>, vector<2x96xf32>
    %cst_19 = arith.constant dense<0.000000e+00> : vector<2x96xf32>
    %16 = tpu.matmul %14, %11, %cst_19 {dimension_numbers = #tpu.dot_dimension_numbers<[1], [0], [0], [1], [0, 0, 1, 1], [], []>} : vector<2x32xf32>, vector<32x96xf32>, vector<2x96xf32> -> vector<2x96xf32>
    %17 = vector.broadcast %13 : vector<1x96xf32> to vector<2x96xf32>
    %18 = arith.addf %16, %17 : vector<2x96xf32>
    %19 = vector.extract_strided_slice %15 {offsets = [0, 0], sizes = [2, 32], strides = [1, 1]} : vector<2x96xf32> to vector<2x32xf32>
    %20 = vector.extract_strided_slice %18 {offsets = [0, 0], sizes = [2, 32], strides = [1, 1]} : vector<2x96xf32> to vector<2x32xf32>
    %21 = arith.addf %19, %20 : vector<2x32xf32>
    %22 = arith.negf %21 : vector<2x32xf32>
    %23 = math.exp %22 : vector<2x32xf32>
    %cst_20 = arith.constant 1.000000e+00 : f32
    %24 = vector.broadcast %cst_20 : f32 to vector<2x32xf32>
    %25 = arith.addf %24, %23 : vector<2x32xf32>
    %26 = arith.divf %24, %25 : vector<2x32xf32>
    %27 = vector.extract_strided_slice %15 {offsets = [0, 32], sizes = [2, 32], strides = [1, 1]} : vector<2x96xf32> to vector<2x32xf32>
    %28 = vector.extract_strided_slice %18 {offsets = [0, 32], sizes = [2, 32], strides = [1, 1]} : vector<2x96xf32> to vector<2x32xf32>
    %29 = arith.addf %27, %28 : vector<2x32xf32>
    %30 = arith.negf %29 : vector<2x32xf32>
    %31 = math.exp %30 : vector<2x32xf32>
    %cst_21 = arith.constant 1.000000e+00 : f32
    %32 = vector.broadcast %cst_21 : f32 to vector<2x32xf32>
    %33 = arith.addf %32, %31 : vector<2x32xf32>
    %34 = arith.divf %32, %33 : vector<2x32xf32>
    %35 = vector.extract_strided_slice %15 {offsets = [0, 64], sizes = [2, 32], strides = [1, 1]} : vector<2x96xf32> to vector<2x32xf32>
    %36 = vector.extract_strided_slice %18 {offsets = [0, 64], sizes = [2, 32], strides = [1, 1]} : vector<2x96xf32> to vector<2x32xf32>
    %37 = arith.mulf %26, %36 : vector<2x32xf32>
    %38 = arith.addf %35, %37 : vector<2x32xf32>
    %39 = math.tanh %38 : vector<2x32xf32>
    %cst_22 = arith.constant 1.000000e+00 : f32
    %40 = vector.broadcast %cst_22 : f32 to vector<2x32xf32>
    %41 = arith.subf %40, %34 : vector<2x32xf32>
    %42 = arith.mulf %41, %39 : vector<2x32xf32>
    %43 = arith.mulf %34, %14 : vector<2x32xf32>
    %44 = arith.addf %42, %43 : vector<2x32xf32>
    %c2 = arith.constant 2 : index
    %c0_23 = arith.constant 0 : index
    %45 = vector.load %arg7[%c2, %c0_23] : memref<16x96xf32, #tpu.memory_space<vmem>>, vector<2x96xf32>
    %cst_24 = arith.constant dense<0.000000e+00> : vector<2x96xf32>
    %46 = tpu.matmul %44, %11, %cst_24 {dimension_numbers = #tpu.dot_dimension_numbers<[1], [0], [0], [1], [0, 0, 1, 1], [], []>} : vector<2x32xf32>, vector<32x96xf32>, vector<2x96xf32> -> vector<2x96xf32>
    %47 = vector.broadcast %13 : vector<1x96xf32> to vector<2x96xf32>
    %48 = arith.addf %46, %47 : vector<2x96xf32>
    %49 = vector.extract_strided_slice %45 {offsets = [0, 0], sizes = [2, 32], strides = [1, 1]} : vector<2x96xf32> to vector<2x32xf32>
    %50 = vector.extract_strided_slice %48 {offsets = [0, 0], sizes = [2, 32], strides = [1, 1]} : vector<2x96xf32> to vector<2x32xf32>
    %51 = arith.addf %49, %50 : vector<2x32xf32>
    %52 = arith.negf %51 : vector<2x32xf32>
    %53 = math.exp %52 : vector<2x32xf32>
    %cst_25 = arith.constant 1.000000e+00 : f32
    %54 = vector.broadcast %cst_25 : f32 to vector<2x32xf32>
    %55 = arith.addf %54, %53 : vector<2x32xf32>
    %56 = arith.divf %54, %55 : vector<2x32xf32>
    %57 = vector.extract_strided_slice %45 {offsets = [0, 32], sizes = [2, 32], strides = [1, 1]} : vector<2x96xf32> to vector<2x32xf32>
    %58 = vector.extract_strided_slice %48 {offsets = [0, 32], sizes = [2, 32], strides = [1, 1]} : vector<2x96xf32> to vector<2x32xf32>
    %59 = arith.addf %57, %58 : vector<2x32xf32>
    %60 = arith.negf %59 : vector<2x32xf32>
    %61 = math.exp %60 : vector<2x32xf32>
    %cst_26 = arith.constant 1.000000e+00 : f32
    %62 = vector.broadcast %cst_26 : f32 to vector<2x32xf32>
    %63 = arith.addf %62, %61 : vector<2x32xf32>
    %64 = arith.divf %62, %63 : vector<2x32xf32>
    %65 = vector.extract_strided_slice %45 {offsets = [0, 64], sizes = [2, 32], strides = [1, 1]} : vector<2x96xf32> to vector<2x32xf32>
    %66 = vector.extract_strided_slice %48 {offsets = [0, 64], sizes = [2, 32], strides = [1, 1]} : vector<2x96xf32> to vector<2x32xf32>
    %67 = arith.mulf %56, %66 : vector<2x32xf32>
    %68 = arith.addf %65, %67 : vector<2x32xf32>
    %69 = math.tanh %68 : vector<2x32xf32>
    %cst_27 = arith.constant 1.000000e+00 : f32
    %70 = vector.broadcast %cst_27 : f32 to vector<2x32xf32>
    %71 = arith.subf %70, %64 : vector<2x32xf32>
    %72 = arith.mulf %71, %69 : vector<2x32xf32>
    %73 = arith.mulf %64, %44 : vector<2x32xf32>
    %74 = arith.addf %72, %73 : vector<2x32xf32>
    %c4 = arith.constant 4 : index
    %c0_28 = arith.constant 0 : index
    %75 = vector.load %arg7[%c4, %c0_28] : memref<16x96xf32, #tpu.memory_space<vmem>>, vector<2x96xf32>
    %cst_29 = arith.constant dense<0.000000e+00> : vector<2x96xf32>
    %76 = tpu.matmul %74, %11, %cst_29 {dimension_numbers = #tpu.dot_dimension_numbers<[1], [0], [0], [1], [0, 0, 1, 1], [], []>} : vector<2x32xf32>, vector<32x96xf32>, vector<2x96xf32> -> vector<2x96xf32>
    %77 = vector.broadcast %13 : vector<1x96xf32> to vector<2x96xf32>
    %78 = arith.addf %76, %77 : vector<2x96xf32>
    %79 = vector.extract_strided_slice %75 {offsets = [0, 0], sizes = [2, 32], strides = [1, 1]} : vector<2x96xf32> to vector<2x32xf32>
    %80 = vector.extract_strided_slice %78 {offsets = [0, 0], sizes = [2, 32], strides = [1, 1]} : vector<2x96xf32> to vector<2x32xf32>
    %81 = arith.addf %79, %80 : vector<2x32xf32>
    %82 = arith.negf %81 : vector<2x32xf32>
    %83 = math.exp %82 : vector<2x32xf32>
    %cst_30 = arith.constant 1.000000e+00 : f32
    %84 = vector.broadcast %cst_30 : f32 to vector<2x32xf32>
    %85 = arith.addf %84, %83 : vector<2x32xf32>
    %86 = arith.divf %84, %85 : vector<2x32xf32>
    %87 = vector.extract_strided_slice %75 {offsets = [0, 32], sizes = [2, 32], strides = [1, 1]} : vector<2x96xf32> to vector<2x32xf32>
    %88 = vector.extract_strided_slice %78 {offsets = [0, 32], sizes = [2, 32], strides = [1, 1]} : vector<2x96xf32> to vector<2x32xf32>
    %89 = arith.addf %87, %88 : vector<2x32xf32>
    %90 = arith.negf %89 : vector<2x32xf32>
    %91 = math.exp %90 : vector<2x32xf32>
    %cst_31 = arith.constant 1.000000e+00 : f32
    %92 = vector.broadcast %cst_31 : f32 to vector<2x32xf32>
    %93 = arith.addf %92, %91 : vector<2x32xf32>
    %94 = arith.divf %92, %93 : vector<2x32xf32>
    %95 = vector.extract_strided_slice %75 {offsets = [0, 64], sizes = [2, 32], strides = [1, 1]} : vector<2x96xf32> to vector<2x32xf32>
    %96 = vector.extract_strided_slice %78 {offsets = [0, 64], sizes = [2, 32], strides = [1, 1]} : vector<2x96xf32> to vector<2x32xf32>
    %97 = arith.mulf %86, %96 : vector<2x32xf32>
    %98 = arith.addf %95, %97 : vector<2x32xf32>
    %99 = math.tanh %98 : vector<2x32xf32>
    %cst_32 = arith.constant 1.000000e+00 : f32
    %100 = vector.broadcast %cst_32 : f32 to vector<2x32xf32>
    %101 = arith.subf %100, %94 : vector<2x32xf32>
    %102 = arith.mulf %101, %99 : vector<2x32xf32>
    %103 = arith.mulf %94, %74 : vector<2x32xf32>
    %104 = arith.addf %102, %103 : vector<2x32xf32>
    %c6 = arith.constant 6 : index
    %c0_33 = arith.constant 0 : index
    %105 = vector.load %arg7[%c6, %c0_33] : memref<16x96xf32, #tpu.memory_space<vmem>>, vector<2x96xf32>
    %cst_34 = arith.constant dense<0.000000e+00> : vector<2x96xf32>
    %106 = tpu.matmul %104, %11, %cst_34 {dimension_numbers = #tpu.dot_dimension_numbers<[1], [0], [0], [1], [0, 0, 1, 1], [], []>} : vector<2x32xf32>, vector<32x96xf32>, vector<2x96xf32> -> vector<2x96xf32>
    %107 = vector.broadcast %13 : vector<1x96xf32> to vector<2x96xf32>
    %108 = arith.addf %106, %107 : vector<2x96xf32>
    %109 = vector.extract_strided_slice %105 {offsets = [0, 0], sizes = [2, 32], strides = [1, 1]} : vector<2x96xf32> to vector<2x32xf32>
    %110 = vector.extract_strided_slice %108 {offsets = [0, 0], sizes = [2, 32], strides = [1, 1]} : vector<2x96xf32> to vector<2x32xf32>
    %111 = arith.addf %109, %110 : vector<2x32xf32>
    %112 = arith.negf %111 : vector<2x32xf32>
    %113 = math.exp %112 : vector<2x32xf32>
    %cst_35 = arith.constant 1.000000e+00 : f32
    %114 = vector.broadcast %cst_35 : f32 to vector<2x32xf32>
    %115 = arith.addf %114, %113 : vector<2x32xf32>
    %116 = arith.divf %114, %115 : vector<2x32xf32>
    %117 = vector.extract_strided_slice %105 {offsets = [0, 32], sizes = [2, 32], strides = [1, 1]} : vector<2x96xf32> to vector<2x32xf32>
    %118 = vector.extract_strided_slice %108 {offsets = [0, 32], sizes = [2, 32], strides = [1, 1]} : vector<2x96xf32> to vector<2x32xf32>
    %119 = arith.addf %117, %118 : vector<2x32xf32>
    %120 = arith.negf %119 : vector<2x32xf32>
    %121 = math.exp %120 : vector<2x32xf32>
    %cst_36 = arith.constant 1.000000e+00 : f32
    %122 = vector.broadcast %cst_36 : f32 to vector<2x32xf32>
    %123 = arith.addf %122, %121 : vector<2x32xf32>
    %124 = arith.divf %122, %123 : vector<2x32xf32>
    %125 = vector.extract_strided_slice %105 {offsets = [0, 64], sizes = [2, 32], strides = [1, 1]} : vector<2x96xf32> to vector<2x32xf32>
    %126 = vector.extract_strided_slice %108 {offsets = [0, 64], sizes = [2, 32], strides = [1, 1]} : vector<2x96xf32> to vector<2x32xf32>
    %127 = arith.mulf %116, %126 : vector<2x32xf32>
    %128 = arith.addf %125, %127 : vector<2x32xf32>
    %129 = math.tanh %128 : vector<2x32xf32>
    %cst_37 = arith.constant 1.000000e+00 : f32
    %130 = vector.broadcast %cst_37 : f32 to vector<2x32xf32>
    %131 = arith.subf %130, %124 : vector<2x32xf32>
    %132 = arith.mulf %131, %129 : vector<2x32xf32>
    %133 = arith.mulf %124, %104 : vector<2x32xf32>
    %134 = arith.addf %132, %133 : vector<2x32xf32>
    %c8 = arith.constant 8 : index
    %c0_38 = arith.constant 0 : index
    %135 = vector.load %arg7[%c8, %c0_38] : memref<16x96xf32, #tpu.memory_space<vmem>>, vector<2x96xf32>
    %cst_39 = arith.constant dense<0.000000e+00> : vector<2x96xf32>
    %136 = tpu.matmul %134, %11, %cst_39 {dimension_numbers = #tpu.dot_dimension_numbers<[1], [0], [0], [1], [0, 0, 1, 1], [], []>} : vector<2x32xf32>, vector<32x96xf32>, vector<2x96xf32> -> vector<2x96xf32>
    %137 = vector.broadcast %13 : vector<1x96xf32> to vector<2x96xf32>
    %138 = arith.addf %136, %137 : vector<2x96xf32>
    %139 = vector.extract_strided_slice %135 {offsets = [0, 0], sizes = [2, 32], strides = [1, 1]} : vector<2x96xf32> to vector<2x32xf32>
    %140 = vector.extract_strided_slice %138 {offsets = [0, 0], sizes = [2, 32], strides = [1, 1]} : vector<2x96xf32> to vector<2x32xf32>
    %141 = arith.addf %139, %140 : vector<2x32xf32>
    %142 = arith.negf %141 : vector<2x32xf32>
    %143 = math.exp %142 : vector<2x32xf32>
    %cst_40 = arith.constant 1.000000e+00 : f32
    %144 = vector.broadcast %cst_40 : f32 to vector<2x32xf32>
    %145 = arith.addf %144, %143 : vector<2x32xf32>
    %146 = arith.divf %144, %145 : vector<2x32xf32>
    %147 = vector.extract_strided_slice %135 {offsets = [0, 32], sizes = [2, 32], strides = [1, 1]} : vector<2x96xf32> to vector<2x32xf32>
    %148 = vector.extract_strided_slice %138 {offsets = [0, 32], sizes = [2, 32], strides = [1, 1]} : vector<2x96xf32> to vector<2x32xf32>
    %149 = arith.addf %147, %148 : vector<2x32xf32>
    %150 = arith.negf %149 : vector<2x32xf32>
    %151 = math.exp %150 : vector<2x32xf32>
    %cst_41 = arith.constant 1.000000e+00 : f32
    %152 = vector.broadcast %cst_41 : f32 to vector<2x32xf32>
    %153 = arith.addf %152, %151 : vector<2x32xf32>
    %154 = arith.divf %152, %153 : vector<2x32xf32>
    %155 = vector.extract_strided_slice %135 {offsets = [0, 64], sizes = [2, 32], strides = [1, 1]} : vector<2x96xf32> to vector<2x32xf32>
    %156 = vector.extract_strided_slice %138 {offsets = [0, 64], sizes = [2, 32], strides = [1, 1]} : vector<2x96xf32> to vector<2x32xf32>
    %157 = arith.mulf %146, %156 : vector<2x32xf32>
    %158 = arith.addf %155, %157 : vector<2x32xf32>
    %159 = math.tanh %158 : vector<2x32xf32>
    %cst_42 = arith.constant 1.000000e+00 : f32
    %160 = vector.broadcast %cst_42 : f32 to vector<2x32xf32>
    %161 = arith.subf %160, %154 : vector<2x32xf32>
    %162 = arith.mulf %161, %159 : vector<2x32xf32>
    %163 = arith.mulf %154, %134 : vector<2x32xf32>
    %164 = arith.addf %162, %163 : vector<2x32xf32>
    %c10 = arith.constant 10 : index
    %c0_43 = arith.constant 0 : index
    %165 = vector.load %arg7[%c10, %c0_43] : memref<16x96xf32, #tpu.memory_space<vmem>>, vector<2x96xf32>
    %cst_44 = arith.constant dense<0.000000e+00> : vector<2x96xf32>
    %166 = tpu.matmul %164, %11, %cst_44 {dimension_numbers = #tpu.dot_dimension_numbers<[1], [0], [0], [1], [0, 0, 1, 1], [], []>} : vector<2x32xf32>, vector<32x96xf32>, vector<2x96xf32> -> vector<2x96xf32>
    %167 = vector.broadcast %13 : vector<1x96xf32> to vector<2x96xf32>
    %168 = arith.addf %166, %167 : vector<2x96xf32>
    %169 = vector.extract_strided_slice %165 {offsets = [0, 0], sizes = [2, 32], strides = [1, 1]} : vector<2x96xf32> to vector<2x32xf32>
    %170 = vector.extract_strided_slice %168 {offsets = [0, 0], sizes = [2, 32], strides = [1, 1]} : vector<2x96xf32> to vector<2x32xf32>
    %171 = arith.addf %169, %170 : vector<2x32xf32>
    %172 = arith.negf %171 : vector<2x32xf32>
    %173 = math.exp %172 : vector<2x32xf32>
    %cst_45 = arith.constant 1.000000e+00 : f32
    %174 = vector.broadcast %cst_45 : f32 to vector<2x32xf32>
    %175 = arith.addf %174, %173 : vector<2x32xf32>
    %176 = arith.divf %174, %175 : vector<2x32xf32>
    %177 = vector.extract_strided_slice %165 {offsets = [0, 32], sizes = [2, 32], strides = [1, 1]} : vector<2x96xf32> to vector<2x32xf32>
    %178 = vector.extract_strided_slice %168 {offsets = [0, 32], sizes = [2, 32], strides = [1, 1]} : vector<2x96xf32> to vector<2x32xf32>
    %179 = arith.addf %177, %178 : vector<2x32xf32>
    %180 = arith.negf %179 : vector<2x32xf32>
    %181 = math.exp %180 : vector<2x32xf32>
    %cst_46 = arith.constant 1.000000e+00 : f32
    %182 = vector.broadcast %cst_46 : f32 to vector<2x32xf32>
    %183 = arith.addf %182, %181 : vector<2x32xf32>
    %184 = arith.divf %182, %183 : vector<2x32xf32>
    %185 = vector.extract_strided_slice %165 {offsets = [0, 64], sizes = [2, 32], strides = [1, 1]} : vector<2x96xf32> to vector<2x32xf32>
    %186 = vector.extract_strided_slice %168 {offsets = [0, 64], sizes = [2, 32], strides = [1, 1]} : vector<2x96xf32> to vector<2x32xf32>
    %187 = arith.mulf %176, %186 : vector<2x32xf32>
    %188 = arith.addf %185, %187 : vector<2x32xf32>
    %189 = math.tanh %188 : vector<2x32xf32>
    %cst_47 = arith.constant 1.000000e+00 : f32
    %190 = vector.broadcast %cst_47 : f32 to vector<2x32xf32>
    %191 = arith.subf %190, %184 : vector<2x32xf32>
    %192 = arith.mulf %191, %189 : vector<2x32xf32>
    %193 = arith.mulf %184, %164 : vector<2x32xf32>
    %194 = arith.addf %192, %193 : vector<2x32xf32>
    %c12 = arith.constant 12 : index
    %c0_48 = arith.constant 0 : index
    %195 = vector.load %arg7[%c12, %c0_48] : memref<16x96xf32, #tpu.memory_space<vmem>>, vector<2x96xf32>
    %cst_49 = arith.constant dense<0.000000e+00> : vector<2x96xf32>
    %196 = tpu.matmul %194, %11, %cst_49 {dimension_numbers = #tpu.dot_dimension_numbers<[1], [0], [0], [1], [0, 0, 1, 1], [], []>} : vector<2x32xf32>, vector<32x96xf32>, vector<2x96xf32> -> vector<2x96xf32>
    %197 = vector.broadcast %13 : vector<1x96xf32> to vector<2x96xf32>
    %198 = arith.addf %196, %197 : vector<2x96xf32>
    %199 = vector.extract_strided_slice %195 {offsets = [0, 0], sizes = [2, 32], strides = [1, 1]} : vector<2x96xf32> to vector<2x32xf32>
    %200 = vector.extract_strided_slice %198 {offsets = [0, 0], sizes = [2, 32], strides = [1, 1]} : vector<2x96xf32> to vector<2x32xf32>
    %201 = arith.addf %199, %200 : vector<2x32xf32>
    %202 = arith.negf %201 : vector<2x32xf32>
    %203 = math.exp %202 : vector<2x32xf32>
    %cst_50 = arith.constant 1.000000e+00 : f32
    %204 = vector.broadcast %cst_50 : f32 to vector<2x32xf32>
    %205 = arith.addf %204, %203 : vector<2x32xf32>
    %206 = arith.divf %204, %205 : vector<2x32xf32>
    %207 = vector.extract_strided_slice %195 {offsets = [0, 32], sizes = [2, 32], strides = [1, 1]} : vector<2x96xf32> to vector<2x32xf32>
    %208 = vector.extract_strided_slice %198 {offsets = [0, 32], sizes = [2, 32], strides = [1, 1]} : vector<2x96xf32> to vector<2x32xf32>
    %209 = arith.addf %207, %208 : vector<2x32xf32>
    %210 = arith.negf %209 : vector<2x32xf32>
    %211 = math.exp %210 : vector<2x32xf32>
    %cst_51 = arith.constant 1.000000e+00 : f32
    %212 = vector.broadcast %cst_51 : f32 to vector<2x32xf32>
    %213 = arith.addf %212, %211 : vector<2x32xf32>
    %214 = arith.divf %212, %213 : vector<2x32xf32>
    %215 = vector.extract_strided_slice %195 {offsets = [0, 64], sizes = [2, 32], strides = [1, 1]} : vector<2x96xf32> to vector<2x32xf32>
    %216 = vector.extract_strided_slice %198 {offsets = [0, 64], sizes = [2, 32], strides = [1, 1]} : vector<2x96xf32> to vector<2x32xf32>
    %217 = arith.mulf %206, %216 : vector<2x32xf32>
    %218 = arith.addf %215, %217 : vector<2x32xf32>
    %219 = math.tanh %218 : vector<2x32xf32>
    %cst_52 = arith.constant 1.000000e+00 : f32
    %220 = vector.broadcast %cst_52 : f32 to vector<2x32xf32>
    %221 = arith.subf %220, %214 : vector<2x32xf32>
    %222 = arith.mulf %221, %219 : vector<2x32xf32>
    %223 = arith.mulf %214, %194 : vector<2x32xf32>
    %224 = arith.addf %222, %223 : vector<2x32xf32>
    %c14 = arith.constant 14 : index
    %c0_53 = arith.constant 0 : index
    %225 = vector.load %arg7[%c14, %c0_53] : memref<16x96xf32, #tpu.memory_space<vmem>>, vector<2x96xf32>
    %cst_54 = arith.constant dense<0.000000e+00> : vector<2x96xf32>
    %226 = tpu.matmul %224, %11, %cst_54 {dimension_numbers = #tpu.dot_dimension_numbers<[1], [0], [0], [1], [0, 0, 1, 1], [], []>} : vector<2x32xf32>, vector<32x96xf32>, vector<2x96xf32> -> vector<2x96xf32>
    %227 = vector.broadcast %13 : vector<1x96xf32> to vector<2x96xf32>
    %228 = arith.addf %226, %227 : vector<2x96xf32>
    %229 = vector.extract_strided_slice %225 {offsets = [0, 0], sizes = [2, 32], strides = [1, 1]} : vector<2x96xf32> to vector<2x32xf32>
    %230 = vector.extract_strided_slice %228 {offsets = [0, 0], sizes = [2, 32], strides = [1, 1]} : vector<2x96xf32> to vector<2x32xf32>
    %231 = arith.addf %229, %230 : vector<2x32xf32>
    %232 = arith.negf %231 : vector<2x32xf32>
    %233 = math.exp %232 : vector<2x32xf32>
    %cst_55 = arith.constant 1.000000e+00 : f32
    %234 = vector.broadcast %cst_55 : f32 to vector<2x32xf32>
    %235 = arith.addf %234, %233 : vector<2x32xf32>
    %236 = arith.divf %234, %235 : vector<2x32xf32>
    %237 = vector.extract_strided_slice %225 {offsets = [0, 32], sizes = [2, 32], strides = [1, 1]} : vector<2x96xf32> to vector<2x32xf32>
    %238 = vector.extract_strided_slice %228 {offsets = [0, 32], sizes = [2, 32], strides = [1, 1]} : vector<2x96xf32> to vector<2x32xf32>
    %239 = arith.addf %237, %238 : vector<2x32xf32>
    %240 = arith.negf %239 : vector<2x32xf32>
    %241 = math.exp %240 : vector<2x32xf32>
    %cst_56 = arith.constant 1.000000e+00 : f32
    %242 = vector.broadcast %cst_56 : f32 to vector<2x32xf32>
    %243 = arith.addf %242, %241 : vector<2x32xf32>
    %244 = arith.divf %242, %243 : vector<2x32xf32>
    %245 = vector.extract_strided_slice %225 {offsets = [0, 64], sizes = [2, 32], strides = [1, 1]} : vector<2x96xf32> to vector<2x32xf32>
    %246 = vector.extract_strided_slice %228 {offsets = [0, 64], sizes = [2, 32], strides = [1, 1]} : vector<2x96xf32> to vector<2x32xf32>
    %247 = arith.mulf %236, %246 : vector<2x32xf32>
    %248 = arith.addf %245, %247 : vector<2x32xf32>
    %249 = math.tanh %248 : vector<2x32xf32>
    %cst_57 = arith.constant 1.000000e+00 : f32
    %250 = vector.broadcast %cst_57 : f32 to vector<2x32xf32>
    %251 = arith.subf %250, %244 : vector<2x32xf32>
    %252 = arith.mulf %251, %249 : vector<2x32xf32>
    %253 = arith.mulf %244, %224 : vector<2x32xf32>
    %254 = arith.addf %252, %253 : vector<2x32xf32>
    %255 = tpu.concatenate %44, %74, %104, %134, %164, %194, %224, %254 in 0 : vector<2x32xf32>, vector<2x32xf32>, vector<2x32xf32>, vector<2x32xf32>, vector<2x32xf32>, vector<2x32xf32>, vector<2x32xf32>, vector<2x32xf32> -> vector<16x32xf32>
    %c0_58 = arith.constant 0 : index
    %c0_59 = arith.constant 0 : index
    %c0_60 = arith.constant 0 : index
    %256 = vector.load %arg6[%c0_58, %c0_59, %c0_60] : memref<1x16x32xf32, #tpu.memory_space<vmem>>, vector<1x16x32xf32>
    %257 = vector.shape_cast %256 : vector<1x16x32xf32> to vector<16x32xf32>
    %258 = vector.shape_cast %255 : vector<16x32xf32> to vector<1x16x32xf32>
    tpu.vector_store %arg6[%c0_58, %c0_59, %c0_60], %258 {strides = array<i32>} : memref<1x16x32xf32, #tpu.memory_space<vmem>>, vector<1x16x32xf32>,
    return
  }
  func.func @transform_0(%arg0: i32) -> (i32, i32, i32) {
    %c0_i32 = arith.constant 0 : i32
    %c0_i32_0 = arith.constant 0 : i32
    %c0_i32_1 = arith.constant 0 : i32
    return %arg0, %c0_i32, %c0_i32_0 : i32, i32, i32
  }
  func.func @transform_1(%arg0: i32) -> (i32, i32, i32) {
    %c0_i32 = arith.constant 0 : i32
    %c0_i32_0 = arith.constant 0 : i32
    %c0_i32_1 = arith.constant 0 : i32
    return %arg0, %c0_i32, %c0_i32_0 : i32, i32, i32
  }
  func.func @transform_2(%arg0: i32) -> (i32, i32, i32) {
    %c0_i32 = arith.constant 0 : i32
    %c0_i32_0 = arith.constant 0 : i32
    %c0_i32_1 = arith.constant 0 : i32
    return %arg0, %c0_i32, %c0_i32_0 : i32, i32, i32
  }
  func.func @transform_3(%arg0: i32) -> (i32, i32, i32) {
    %c0_i32 = arith.constant 0 : i32
    %c0_i32_0 = arith.constant 0 : i32
    %c0_i32_1 = arith.constant 0 : i32
    return %arg0, %c0_i32, %c0_i32_0 : i32, i32, i32
  }
  func.func @transform_4(%arg0: i32) -> (i32, i32, i32) {
    %c0_i32 = arith.constant 0 : i32
    %c0_i32_0 = arith.constant 0 : i32
    %c0_i32_1 = arith.constant 0 : i32
    return %arg0, %c0_i32, %c0_i32_0 : i32, i32, i32
  }
  func.func @transform_5(%arg0: i32) -> (i32, i32, i32) {
    %c0_i32 = arith.constant 0 : i32
    %c0_i32_0 = arith.constant 0 : i32
    %c0_i32_1 = arith.constant 0 : i32
    return %arg0, %c0_i32, %c0_i32_0 : i32, i32, i32
  }
}

</mosaic_0001>

<llo_original>
// kernel: forward.2
$region0: #{forward.2}
  #allocation0 [shape = 'u32[]', space=smem, size = 0x4, offset = 0x4, fixed_abs, tag = 'smem constant byte address 0x4 - core index']
  #allocation1 [shape = 'u32[72,128]{1,0:T(1,128)}', space=vmem, size = 0x9000, scoped, tag = 'internal scratch']
  #allocation2 [shape = 'f32[16,96]{1,0:T(8,128)}', space=vmem, size = 0x2000, scoped, tag = 'scratch operand']
  %s0 = inlined_call_operand.vmem [shape: f32[2,16,32], index: 0, kind: input, shape index: {}]
  %s1 = inlined_call_operand.hbm [shape: f32[2,32,96], index: 1, kind: input, shape index: {}]
  %s2 = inlined_call_operand.hbm [shape: f32[2,32,96], index: 2, kind: input, shape index: {}]
  %s3 = inlined_call_operand.vmem [shape: f32[2,1,96], index: 3, kind: input, shape index: {}]
  %s4 = inlined_call_operand.vmem [shape: f32[2,1,96], index: 4, kind: input, shape index: {}]
  %s5 = inlined_call_operand.vmem [shape: f32[2,16,32], index: 5, kind: output, shape index: {}]
  %s6 = sld [smem:[#allocation0]]
  $region61: #{forward.2} parent=0
    _
  %s8 = ssub.s32 1, %s6
  %s9 = scalar_select 0, %s8, %s6
  $region1: #{forward.2} parent=0
    #allocation3 [shape = 'u8[32768]{0}', space=vmem, size = 0x8000, scoped, tag = 'input window, operand 1']
    #allocation4 [shape = 's32[2]{0}', space=sflag, size = 0x8, scoped, tag = 'scoped memory for forward.2']
    #allocation5 [shape = 'u8[32768]{0}', space=vmem, size = 0x8000, scoped, tag = 'input window, operand 2']
    #allocation6 [shape = 's32[2]{0}', space=sflag, size = 0x8, scoped, tag = 'scoped memory for forward.2']
    %10 = vsyncpa [#allocation4], 0
    %s11 = scalar_lea.sflag [#allocation4], 1
    %12 = vsyncpa %s11, 0
    %13 = vsyncpa [#allocation6], 0
    %s14 = scalar_lea.sflag [#allocation6], 1
    %15 = vsyncpa %s14, 0
    loop: start=0, step=1, limit=4
    $region2: #{forward.2} parent=1 // loop_pre_header
      _
    $region3: #{forward.2} parent=1 // loop_header
      %s17 = sphi 0, %s21
      %p18 = scmp.ge.s32.totalorder %s17, 4
      %s27 = sphi 0, %s29
      %s30 = sphi 0, %s27
      %s31 = sphi 0, %s30
      %s47 = sphi 0, %s31
      %s53 = sphi 0, %s55
      %s56 = sphi 0, %s53
      %s57 = sphi 0, %s56
      %s73 = sphi 0, %s57
      %s79 = sphi 0, %s81
      %s82 = sphi 0, %s79
      %s83 = sphi 0, %s82
      %s99 = sphi 0, %s83
      %s105 = sphi 0, %s107
      %s108 = sphi 0, %s105
      %s109 = sphi 0, %s108
      %s125 = sphi 0, %s109
      %s131 = sphi 0, %s133
      %s134 = sphi 0, %s131
      %s135 = sphi 0, %s134
      %s151 = sphi 0, %s135
      %s157 = sphi 0, %s159
      %s160 = sphi 0, %s157
      %s161 = sphi 0, %s160
      %s177 = sphi 0, %s161
    $region4: #{forward.2} parent=1 // loop_header_branch
      %20 = sbr.rel (%p18) target = $region8
    $region5: #{forward.2} parent=1 // loop_body
      %s22 = ssub.s32 %s17, 1
      %s23 = ssub.s32 %s17, 2
      %s24 = sadd.s32 %s17, 1
      %s25 = ssub.s32 %s17, %s24
      %p26 = scmp.eq.s32.totalorder %s25, 0
      %s28 = sadd.s32 %s27, 1
      %s29 = scalar_select %p26, %s27, %s28
      %p32 = pneg %p26
      %p33 = scmp.eq.s32.totalorder %s17, 1
      %p34 = por %p32, %p33
      %p35 = scmp.ne.s32.totalorder %s27, %s30
      %p36 = scmp.eq.s32.totalorder %s17, 0
      %p37 = por %p35, %p36
      %p38 = scmp.ne.s32.totalorder %s27, %s30
      %p39 = scmp.eq.s32.totalorder %s22, 1
      %p40 = por %p38, %p39
      %p41 = scmp.ne.s32.totalorder %s30, %s31
      %p42 = scmp.eq.s32.totalorder %s22, 0
      %p43 = por %p41, %p42
      %p44 = scmp.ne.s32.totalorder %s30, %s31
      %p45 = scmp.eq.s32.totalorder %s23, 1
      %p46 = por %p44, %p45
      %p48 = scmp.ne.s32.totalorder %s31, %s47
      %p49 = scmp.eq.s32.totalorder %s23, 0
      %p50 = por %p48, %p49
      %s51 = ssub.s32 %s17, %s24
      %p52 = scmp.eq.s32.totalorder %s51, 0
      %s54 = sadd.s32 %s53, 1
      %s55 = scalar_select %p52, %s53, %s54
      %p58 = pneg %p52
      %p59 = scmp.eq.s32.totalorder %s17, 1
      %p60 = por %p58, %p59
      %p61 = scmp.ne.s32.totalorder %s53, %s56
      %p62 = scmp.eq.s32.totalorder %s17, 0
      %p63 = por %p61, %p62
      %p64 = scmp.ne.s32.totalorder %s53, %s56
      %p65 = scmp.eq.s32.totalorder %s22, 1
      %p66 = por %p64, %p65
      %p67 = scmp.ne.s32.totalorder %s56, %s57
      %p68 = scmp.eq.s32.totalorder %s22, 0
      %p69 = por %p67, %p68
      %p70 = scmp.ne.s32.totalorder %s56, %s57
      %p71 = scmp.eq.s32.totalorder %s23, 1
      %p72 = por %p70, %p71
      %p74 = scmp.ne.s32.totalorder %s57, %s73
      %p75 = scmp.eq.s32.totalorder %s23, 0
      %p76 = por %p74, %p75
      %s77 = ssub.s32 %s17, %s24
      %p78 = scmp.eq.s32.totalorder %s77, 0
      %s80 = sadd.s32 %s79, 1
      %s81 = scalar_select %p78, %s79, %s80
      %p84 = pneg %p78
      %p85 = scmp.eq.s32.totalorder %s17, 1
      %p86 = por %p84, %p85
      %p87 = scmp.ne.s32.totalorder %s79, %s82
      %p88 = scmp.eq.s32.totalorder %s17, 0
      %p89 = por %p87, %p88
      %p90 = scmp.ne.s32.totalorder %s79, %s82
      %p91 = scmp.eq.s32.totalorder %s22, 1
      %p92 = por %p90, %p91
      %p93 = scmp.ne.s32.totalorder %s82, %s83
      %p94 = scmp.eq.s32.totalorder %s22, 0
      %p95 = por %p93, %p94
      %p96 = scmp.ne.s32.totalorder %s82, %s83
      %p97 = scmp.eq.s32.totalorder %s23, 1
      %p98 = por %p96, %p97
      %p100 = scmp.ne.s32.totalorder %s83, %s99
      %p101 = scmp.eq.s32.totalorder %s23, 0
      %p102 = por %p100, %p101
      %s103 = ssub.s32 %s17, %s24
      %p104 = scmp.eq.s32.totalorder %s103, 0
      %s106 = sadd.s32 %s105, 1
      %s107 = scalar_select %p104, %s105, %s106
      %p110 = pneg %p104
      %p111 = scmp.eq.s32.totalorder %s17, 1
      %p112 = por %p110, %p111
      %p113 = scmp.ne.s32.totalorder %s105, %s108
      %p114 = scmp.eq.s32.totalorder %s17, 0
      %p115 = por %p113, %p114
      %p116 = scmp.ne.s32.totalorder %s105, %s108
      %p117 = scmp.eq.s32.totalorder %s22, 1
      %p118 = por %p116, %p117
      %p119 = scmp.ne.s32.totalorder %s108, %s109
      %p120 = scmp.eq.s32.totalorder %s22, 0
      %p121 = por %p119, %p120
      %p122 = scmp.ne.s32.totalorder %s108, %s109
      %p123 = scmp.eq.s32.totalorder %s23, 1
      %p124 = por %p122, %p123
      %p126 = scmp.ne.s32.totalorder %s109, %s125
      %p127 = scmp.eq.s32.totalorder %s23, 0
      %p128 = por %p126, %p127
      %s129 = ssub.s32 %s17, %s24
      %p130 = scmp.eq.s32.totalorder %s129, 0
      %s132 = sadd.s32 %s131, 1
      %s133 = scalar_select %p130, %s131, %s132
      %p136 = pneg %p130
      %p137 = scmp.eq.s32.totalorder %s17, 1
      %p138 = por %p136, %p137
      %p139 = scmp.ne.s32.totalorder %s131, %s134
      %p140 = scmp.eq.s32.totalorder %s17, 0
      %p141 = por %p139, %p140
      %p142 = scmp.ne.s32.totalorder %s131, %s134
      %p143 = scmp.eq.s32.totalorder %s22, 1
      %p144 = por %p142, %p143
      %p145 = scmp.ne.s32.totalorder %s134, %s135
      %p146 = scmp.eq.s32.totalorder %s22, 0
      %p147 = por %p145, %p146
      %p148 = scmp.ne.s32.totalorder %s134, %s135
      %p149 = scmp.eq.s32.totalorder %s23, 1
      %p150 = por %p148, %p149
      %p152 = scmp.ne.s32.totalorder %s135, %s151
      %p153 = scmp.eq.s32.totalorder %s23, 0
      %p154 = por %p152, %p153
      %s155 = ssub.s32 %s17, %s24
      %p156 = scmp.eq.s32.totalorder %s155, 0
      %s158 = sadd.s32 %s157, 1
      %s159 = scalar_select %p156, %s157, %s158
      %p162 = pneg %p156
      %p163 = scmp.eq.s32.totalorder %s17, 1
      %p164 = por %p162, %p163
      %p165 = scmp.ne.s32.totalorder %s157, %s160
      %p166 = scmp.eq.s32.totalorder %s17, 0
      %p167 = por %p165, %p166
      %p168 = scmp.ne.s32.totalorder %s157, %s160
      %p169 = scmp.eq.s32.totalorder %s22, 1
      %p170 = por %p168, %p169
      %p171 = scmp.ne.s32.totalorder %s160, %s161
      %p172 = scmp.eq.s32.totalorder %s22, 0
      %p173 = por %p171, %p172
      %p174 = scmp.ne.s32.totalorder %s160, %s161
      %p175 = scmp.eq.s32.totalorder %s23, 1
      %p176 = por %p174, %p175
      %p178 = scmp.ne.s32.totalorder %s161, %s177
      %p179 = scmp.eq.s32.totalorder %s23, 0
      %p180 = por %p178, %p179
      %p181 = scmp.le.s32.totalorder 1, %s17
      %p182 = scmp.lt.s32.totalorder %s17, 3
      %p183 = pnand %p181, %p182
      %p184 = pneg %p183
      // Predicated region
      $region9: #{forward.2} parent=5 // pred_check
        _
      $region10: #{forward.2} parent=5 // pred_check_branch
        %186 = sbr.rel (%p183) target = $region12
      $region11: #{forward.2} parent=5 // pred_region
        %s187 = ssub.s32 %s17, 1
      $region12: #{forward.2} parent=5 // pred_fallthru
        _
      %p188 = scmp.lt.s32.totalorder %s17, 2
      // Predicated region
      $region13: #{forward.2} parent=5 // pred_check
        %p189 = pneg %p188
      $region14: #{forward.2} parent=5 // pred_check_branch
        %191 = sbr.rel (%p189) target = $region16
      $region15: #{forward.2} parent=5 // pred_region
        // Predicated region
        $region17: #{forward.2} parent=15 // pred_check
          %p192 = pneg %p37
        $region18: #{forward.2} parent=15 // pred_check_branch
          %194 = sbr.rel (%p192) target = $region20
        $region19: #{forward.2} parent=15 // pred_region
          %p195 = scmp.lt.s32.totalorder %s17, 1
          %s196 = scalar_select %p195, %s17, 1
          %s197 = smul.addr %s196, 2
          %s198 = smul.addr %s197, 8
          %s199 = scalar_lea.vmem %s0, %s198
        $region20: #{forward.2} parent=15 // pred_fallthru
          _
        // Predicated region
        $region21: #{forward.2} parent=15 // pred_check
          %p200 = pneg %p63
        $region22: #{forward.2} parent=15 // pred_check_branch
          %202 = sbr.rel (%p200) target = $region24
        $region23: #{forward.2} parent=15 // pred_region
          %s203 = sand.u32 %s53, 1
          %s204 = scalar_lea.sflag [#allocation4], %s203
          %s205 = sand.u32 %s53, 1
          %s206 = smul.addr %s205, 32
          %s207 = scalar_lea.vmem [#allocation3], %s206
          %209 = vsyncadd %s204, 0
          %s210 = smul.addr %s17, 4
          %s211 = smul.addr %s210, 8
          %s212 = scalar_lea.hbm %s1, %s211
          %s213 = sshll.u32 %s212, 4
          %s214 = int_to_ptr.hbm [resolvable:$true] %s213
          %s215 = sshll.u32 %s207, 4
          %s216 = int_to_ptr.vmem [resolvable:$true] %s215
          %221 = dma.hbm_to_vmem [thread:$0]  %s214, 512, %s216, %s204, 128, 128, 8
        $region24: #{forward.2} parent=15 // pred_fallthru
          _
        // Predicated region
        $region25: #{forward.2} parent=15 // pred_check
          %p222 = pneg %p89
        $region26: #{forward.2} parent=15 // pred_check_branch
          %224 = sbr.rel (%p222) target = $region28
        $region27: #{forward.2} parent=15 // pred_region
          %s225 = sand.u32 %s79, 1
          %s226 = scalar_lea.sflag [#allocation6], %s225
          %s227 = sand.u32 %s79, 1
          %s228 = smul.addr %s227, 32
          %s229 = scalar_lea.vmem [#allocation5], %s228
          %231 = vsyncadd %s226, 0
          %s232 = smul.addr %s17, 4
          %s233 = smul.addr %s232, 8
          %s234 = scalar_lea.hbm %s2, %s233
          %s235 = sshll.u32 %s234, 4
          %s236 = int_to_ptr.hbm [resolvable:$true] %s235
          %s237 = sshll.u32 %s229, 4
          %s238 = int_to_ptr.vmem [resolvable:$true] %s237
          %243 = dma.hbm_to_vmem [thread:$0]  %s236, 512, %s238, %s226, 128, 128, 8
        $region28: #{forward.2} parent=15 // pred_fallthru
          _
        // Predicated region
        $region29: #{forward.2} parent=15 // pred_check
          %p244 = pneg %p115
        $region30: #{forward.2} parent=15 // pred_check_branch
          %246 = sbr.rel (%p244) target = $region32
        $region31: #{forward.2} parent=15 // pred_region
          %p247 = scmp.lt.s32.totalorder %s17, 1
          %s248 = scalar_select %p247, %s17, 1
          %s249 = scalar_lea.vmem %s3, %s248
        $region32: #{forward.2} parent=15 // pred_fallthru
          _
        // Predicated region
        $region33: #{forward.2} parent=15 // pred_check
          %p250 = pneg %p141
        $region34: #{forward.2} parent=15 // pred_check_branch
          %252 = sbr.rel (%p250) target = $region36
        $region35: #{forward.2} parent=15 // pred_region
          %p253 = scmp.lt.s32.totalorder %s17, 1
          %s254 = scalar_select %p253, %s17, 1
          %s255 = scalar_lea.vmem %s4, %s254
        $region36: #{forward.2} parent=15 // pred_fallthru
          _
      $region16: #{forward.2} parent=5 // pred_fallthru
        _
      %p256 = scmp.le.s32.totalorder 1, %s17
      %p257 = scmp.lt.s32.totalorder %s17, 3
      %p258 = pnand %p256, %p257
      %p259 = pneg %p258
      // Predicated region
      $region37: #{forward.2} parent=5 // pred_check
        _
      $region38: #{forward.2} parent=5 // pred_check_branch
        %261 = sbr.rel (%p258) target = $region40
      $region39: #{forward.2} parent=5 // pred_region
        %s262 = ssub.s32 %s17, 1
        %s263 = sand.u32 %s56, 1
        %s264 = scalar_lea.sflag [#allocation4], %s263
        %s265 = sand.u32 %s56, 1
        %s266 = smul.addr %s265, 32
        %s267 = scalar_lea.vmem [#allocation3], %s266
        // Predicated region
        $region41: #{forward.2} parent=39 // pred_check
          %p268 = pneg %p69
        $region42: #{forward.2} parent=39 // pred_check_branch
          %270 = sbr.rel (%p268) target = $region44
        $region43: #{forward.2} parent=39 // pred_region
          %272 = dma.done %s264, 512
        $region44: #{forward.2} parent=39 // pred_fallthru
          _
        %s273 = sand.u32 %s82, 1
        %s274 = scalar_lea.sflag [#allocation6], %s273
        %s275 = sand.u32 %s82, 1
        %s276 = smul.addr %s275, 32
        %s277 = scalar_lea.vmem [#allocation5], %s276
        // Predicated region
        $region45: #{forward.2} parent=39 // pred_check
          %p278 = pneg %p95
        $region46: #{forward.2} parent=39 // pred_check_branch
          %280 = sbr.rel (%p278) target = $region48
        $region47: #{forward.2} parent=39 // pred_region
          %282 = dma.done %s274, 512
        $region48: #{forward.2} parent=39 // pred_fallthru
          _
        %p283 = scmp.lt.s32.totalorder %s22, 1
        %s284 = scalar_select %p283, %s22, 1
        %s285 = smul.addr %s284, 2
        %s286 = smul.addr %s285, 8
        %s287 = scalar_lea.vmem %s0, %s286
        %p288 = pneg %p43
        %p289 = pneg %p40
        %s290 = sand.u32 %s56, 1
        %s291 = scalar_lea.sflag [#allocation4], %s290
        %s292 = sand.u32 %s56, 1
        %s293 = smul.addr %s292, 32
        %s294 = scalar_lea.vmem [#allocation3], %s293
        %p295 = pneg %p69
        %p296 = pneg %p66
        %s297 = sand.u32 %s82, 1
        %s298 = scalar_lea.sflag [#allocation6], %s297
        %s299 = sand.u32 %s82, 1
        %s300 = smul.addr %s299, 32
        %s301 = scalar_lea.vmem [#allocation5], %s300
        %p302 = pneg %p95
        %p303 = pneg %p92
        %p304 = scmp.lt.s32.totalorder %s22, 1
        %s305 = scalar_select %p304, %s22, 1
        %s306 = scalar_lea.vmem %s3, %s305
        %p307 = pneg %p121
        %p308 = pneg %p118
        %p309 = scmp.lt.s32.totalorder %s22, 1
        %s310 = scalar_select %p309, %s22, 1
        %s311 = scalar_lea.vmem %s4, %s310
        %p312 = pneg %p147
        %p313 = pneg %p144
        %p314 = pneg %p173
        %p315 = pneg %p170
        %p316 = scmp.lt.s32.totalorder %s22, 1
        %s317 = scalar_select %p316, %s22, 1
        %s318 = smul.addr %s317, 2
        %s319 = smul.addr %s318, 8
        %s320 = scalar_lea.vmem %s5, %s319
        %p321 = scmp.lt.s32.totalorder %s22, 1
        %s322 = scalar_select %p321, %s22, 1
        %s323 = smul.addr %s322, 2
        %s324 = smul.addr %s323, 8
        %s325 = scalar_lea.vmem %s0, %s324
        %p326 = scmp.lt.s32.totalorder %s22, 1
        %s327 = scalar_select %p326, %s22, 1
        %s328 = scalar_lea.vmem %s3, %s327
        %p329 = scmp.lt.s32.totalorder %s22, 1
        %s330 = scalar_select %p329, %s22, 1
        %s331 = scalar_lea.vmem %s4, %s330
        %p332 = scmp.lt.s32.totalorder %s22, 1
        %s333 = scalar_select %p332, %s22, 1
        %s334 = smul.addr %s333, 2
        %s335 = smul.addr %s334, 8
        %s336 = scalar_lea.vmem %s5, %s335
        %v337 = vld [vmem:[%s325] sm:$0xff]
        %v338 = vld [vmem:[%s325 + $0x8] sm:$0xff]
        %v339 = vld [vmem:[%s267] sm:$0xff]
        %v340 = vld [vmem:[%s267 + $0x8] sm:$0xff]
        %v341 = vld [vmem:[%s267 + $0x10] sm:$0xff]
        %v342 = vld [vmem:[%s267 + $0x18] sm:$0xff]
        %v343 = vld [vmem:[%s328] sm:$0x1]
        %v345 = vperm.slane %v343, 0
        %vm347 = vcmask 261120
        %v349 = vsel %vm347, %v337, 0
        %v352 = vsel %vm347, %v338, 0
        %354 = vmatpush.msra.mxu0 0.0
        %355 = vmatpush.msra.mxu0 0.0
        %356 = vmatpush.msra.mxu0 0.0
        %357 = vmatpush.msra.mxu0 0.0
        %358 = vmatpush.msra.mxu0 0.0
        %359 = vmatpush.msra.mxu0 0.0
        %360 = vmatpush.msra.mxu0 0.0
        %361 = vmatpush.msra.mxu0 0.0
        %362 = vmatpush.msra.mxu0 0.0
        %363 = vmatpush.msra.mxu0 0.0
        %364 = vmatpush.msra.mxu0 0.0
        %365 = vmatpush.msra.mxu0 0.0
        %366 = vmatpush.msra.mxu0 %v342
        %367 = vmatpush.msra.mxu0 %v341
        %368 = vmatpush.msra.mxu0 %v340
        %369 = vmatpush.msra.mxu0 %v339
        %370 = vmatmul.f32.gmra.mxu0 %v349
        %v371 = vpop.f32.mrf.mxu0
        %v372 = vadd.f32 %v345, %v371
        %373 = vmatmul.f32.gmra.mxu0 %v352
        %v374 = vpop.f32.mrf.mxu0
        %v375 = vadd.f32 %v345, %v374
        %376 = vdwg.mxu0
        %vm377 = vcmask 785408
        %378 = vst.msk [vmem:[#allocation2] sm:$0xff] %vm377, %v372
        %379 = vst.msk [vmem:[#allocation2 + $0x8] sm:$0xff] %vm377, %v375
        %v380 = vld [vmem:[%s277] sm:$0xff]
        %v381 = vld [vmem:[%s277 + $0x8] sm:$0xff]
        %v382 = vld [vmem:[%s277 + $0x10] sm:$0xff]
        %v383 = vld [vmem:[%s277 + $0x18] sm:$0xff]
        %v384 = vld [vmem:[%s331] sm:$0x1]
        %v385 = vld [vmem:[#allocation2] sm:$0x3]
        %v387 = vperm.slane %v384, 0
        %v390 = vsel %vm347, 0.0, 0
        %392 = vmatpush.msra.mxu0 0.0
        %393 = vmatpush.msra.mxu0 0.0
        %394 = vmatpush.msra.mxu0 0.0
        %395 = vmatpush.msra.mxu0 0.0
        %396 = vmatpush.msra.mxu0 0.0
        %397 = vmatpush.msra.mxu0 0.0
        %398 = vmatpush.msra.mxu0 0.0
        %399 = vmatpush.msra.mxu0 0.0
        %400 = vmatpush.msra.mxu0 0.0
        %401 = vmatpush.msra.mxu0 0.0
        %402 = vmatpush.msra.mxu0 0.0
        %403 = vmatpush.msra.mxu0 0.0
        %404 = vmatpush.msra.mxu0 %v383
        %405 = vmatpush.msra.mxu0 %v382
        %406 = vmatpush.msra.mxu0 %v381
        %407 = vmatpush.msra.mxu0 %v380
        %408 = vmatmul.f32.gmra.mxu0 %v390
        %v409 = vpop.f32.mrf.mxu0
        %v410 = vadd.f32 %v387, %v409
        %411 = vdwg.mxu0
        %v412 = vadd.f32 %v385, %v410
        %v413 = vxor.u32 %v412, 2147483648
        %v414 = vmul.f32 %v413, 1.442695
        %v415 = vpow.pop %v414
        %v416 = vadd.f32 %v415, 1.0
        %v417 = vrcp.pop %v416
        %v418 = vmul.f32 %v416, %v417
        %v419 = vsub.f32 1.0, %v418
        %v420 = vmul.f32 %v417, %v419
        %v421 = vadd.f32 %v417, %v420
        %vm422 = vweird.f32 %v416
        %vm423 = vweird.f32 %v417
        %vm424 = vmor %vm422, %vm423
        %v425 = vsel %vm424, %v417, %v421
        %v426 = vand.u32 2147483647, %v416
        %vm427 = vcmp.eq.f32.partialorder %v426, 8.507059e+37
        %v428 = vand.u32 %v416, 2147483648
        %v429 = vor.u32 1.1754944e-38, %v428
        %v430 = vsel %vm427, %v429, %v425
        %v431 = vmul.f32 1.0, %v430
        %433 = vrot.lane.b32.xlu0 %v410, 64
        %v434 = vpop.permute.xlu0 %433
        %v436 = vmul.f32 %v431, %v434
        %438 = vrot.lane.b32.xlu0 %v436, 64
        %v439 = vpop.permute.xlu0 %438
        %v441 = vadd.f32 %v385, %v439
        %v442 = vtanh.pop %v441
        %v443 = vsub.f32 1.0, %v431
        %445 = vrot.lane.b32.xlu0 %v442, 96
        %v446 = vpop.permute.xlu0 %445
        %v448 = vmul.f32 %v443, %v446
        %v449 = vmul.f32 %v431, 0.0
        %v450 = vadd.f32 %v448, %v449
        %v451 = vld [vmem:[#allocation2 + $0x2] sm:$0x3]
        %453 = vrot.lane.b32.xlu0 %v450, 96
        %v454 = vpop.permute.xlu0 %453
        %v455 = vsel %vm347, %v454, 0
        %457 = vmatpush.msra.mxu0 0.0
        %458 = vmatpush.msra.mxu0 0.0
        %459 = vmatpush.msra.mxu0 0.0
        %460 = vmatpush.msra.mxu0 0.0
        %461 = vmatpush.msra.mxu0 0.0
        %462 = vmatpush.msra.mxu0 0.0
        %463 = vmatpush.msra.mxu0 0.0
        %464 = vmatpush.msra.mxu0 0.0
        %465 = vmatpush.msra.mxu0 0.0
        %466 = vmatpush.msra.mxu0 0.0
        %467 = vmatpush.msra.mxu0 0.0
        %468 = vmatpush.msra.mxu0 0.0
        %469 = vmatpush.msra.mxu0 %v383
        %470 = vmatpush.msra.mxu0 %v382
        %471 = vmatpush.msra.mxu0 %v381
        %472 = vmatpush.msra.mxu0 %v380
        %473 = vmatmul.f32.gmra.mxu0 %v455
        %v474 = vpop.f32.mrf.mxu0
        %v475 = vadd.f32 %v387, %v474
        %476 = vdwg.mxu0
        %v477 = vadd.f32 %v451, %v475
        %v478 = vxor.u32 %v477, 2147483648
        %v479 = vmul.f32 %v478, 1.442695
        %v480 = vpow.pop %v479
        %v481 = vadd.f32 %v480, 1.0
        %v482 = vrcp.pop %v481
        %v483 = vmul.f32 %v481, %v482
        %v484 = vsub.f32 1.0, %v483
        %v485 = vmul.f32 %v482, %v484
        %v486 = vadd.f32 %v482, %v485
        %vm487 = vweird.f32 %v481
        %vm488 = vweird.f32 %v482
        %vm489 = vmor %vm487, %vm488
        %v490 = vsel %vm489, %v482, %v486
        %v491 = vand.u32 2147483647, %v481
        %vm492 = vcmp.eq.f32.partialorder %v491, 8.507059e+37
        %v493 = vand.u32 %v481, 2147483648
        %v494 = vor.u32 1.1754944e-38, %v493
        %v495 = vsel %vm492, %v494, %v490
        %v496 = vmul.f32 1.0, %v495
        %498 = vrot.lane.b32.xlu0 %v475, 64
        %v499 = vpop.permute.xlu0 %498
        %v501 = vmul.f32 %v496, %v499
        %503 = vrot.lane.b32.xlu0 %v501, 64
        %v504 = vpop.permute.xlu0 %503
        %v506 = vadd.f32 %v451, %v504
        %v507 = vtanh.pop %v506
        %v508 = vsub.f32 1.0, %v496
        %510 = vrot.lane.b32.xlu0 %v507, 96
        %v511 = vpop.permute.xlu0 %510
        %v513 = vmul.f32 %v508, %v511
        %v514 = vmul.f32 %v496, %v450
        %v515 = vadd.f32 %v513, %v514
        %v516 = vld [vmem:[#allocation2 + $0x4] sm:$0x3]
        %518 = vrot.lane.b32.xlu0 %v515, 96
        %v519 = vpop.permute.xlu0 %518
        %v520 = vsel %vm347, %v519, 0
        %522 = vmatpush.msra.mxu0 0.0
        %523 = vmatpush.msra.mxu0 0.0
        %524 = vmatpush.msra.mxu0 0.0
        %525 = vmatpush.msra.mxu0 0.0
        %526 = vmatpush.msra.mxu0 0.0
        %527 = vmatpush.msra.mxu0 0.0
        %528 = vmatpush.msra.mxu0 0.0
        %529 = vmatpush.msra.mxu0 0.0
        %530 = vmatpush.msra.mxu0 0.0
        %531 = vmatpush.msra.mxu0 0.0
        %532 = vmatpush.msra.mxu0 0.0
        %533 = vmatpush.msra.mxu0 0.0
        %534 = vmatpush.msra.mxu0 %v383
        %535 = vmatpush.msra.mxu0 %v382
        %536 = vmatpush.msra.mxu0 %v381
        %537 = vmatpush.msra.mxu0 %v380
        %538 = vmatmul.f32.gmra.mxu0 %v520
        %v539 = vpop.f32.mrf.mxu0
        %v540 = vadd.f32 %v387, %v539
        %541 = vdwg.mxu0
        %v542 = vadd.f32 %v516, %v540
        %v543 = vxor.u32 %v542, 2147483648
        %v544 = vmul.f32 %v543, 1.442695
        %v545 = vpow.pop %v544
        %v546 = vadd.f32 %v545, 1.0
        %v547 = vrcp.pop %v546
        %v548 = vmul.f32 %v546, %v547
        %v549 = vsub.f32 1.0, %v548
        %v550 = vmul.f32 %v547, %v549
        %v551 = vadd.f32 %v547, %v550
        %vm552 = vweird.f32 %v546
        %vm553 = vweird.f32 %v547
        %vm554 = vmor %vm552, %vm553
        %v555 = vsel %vm554, %v547, %v551
        %v556 = vand.u32 2147483647, %v546
        %vm557 = vcmp.eq.f32.partialorder %v556, 8.507059e+37
        %v558 = vand.u32 %v546, 2147483648
        %v559 = vor.u32 1.1754944e-38, %v558
        %v560 = vsel %vm557, %v559, %v555
        %v561 = vmul.f32 1.0, %v560
        %563 = vrot.lane.b32.xlu0 %v540, 64
        %v564 = vpop.permute.xlu0 %563
        %v566 = vmul.f32 %v561, %v564
        %568 = vrot.lane.b32.xlu0 %v566, 64
        %v569 = vpop.permute.xlu0 %568
        %v571 = vadd.f32 %v516, %v569
        %v572 = vtanh.pop %v571
        %v573 = vsub.f32 1.0, %v561
        %575 = vrot.lane.b32.xlu0 %v572, 96
        %v576 = vpop.permute.xlu0 %575
        %v578 = vmul.f32 %v573, %v576
        %v579 = vmul.f32 %v561, %v515
        %v580 = vadd.f32 %v578, %v579
        %v581 = vld [vmem:[#allocation2 + $0x6] sm:$0x3]
        %583 = vrot.lane.b32.xlu0 %v580, 96
        %v584 = vpop.permute.xlu0 %583
        %v585 = vsel %vm347, %v584, 0
        %587 = vmatpush.msra.mxu0 0.0
        %588 = vmatpush.msra.mxu0 0.0
        %589 = vmatpush.msra.mxu0 0.0
        %590 = vmatpush.msra.mxu0 0.0
        %591 = vmatpush.msra.mxu0 0.0
        %592 = vmatpush.msra.mxu0 0.0
        %593 = vmatpush.msra.mxu0 0.0
        %594 = vmatpush.msra.mxu0 0.0
        %595 = vmatpush.msra.mxu0 0.0
        %596 = vmatpush.msra.mxu0 0.0
        %597 = vmatpush.msra.mxu0 0.0
        %598 = vmatpush.msra.mxu0 0.0
        %599 = vmatpush.msra.mxu0 %v383
        %600 = vmatpush.msra.mxu0 %v382
        %601 = vmatpush.msra.mxu0 %v381
        %602 = vmatpush.msra.mxu0 %v380
        %603 = vmatmul.f32.gmra.mxu0 %v585
        %v604 = vpop.f32.mrf.mxu0
        %v605 = vadd.f32 %v387, %v604
        %606 = vdwg.mxu0
        %v607 = vadd.f32 %v581, %v605
        %v608 = vxor.u32 %v607, 2147483648
        %v609 = vmul.f32 %v608, 1.442695
        %v610 = vpow.pop %v609
        %v611 = vadd.f32 %v610, 1.0
        %v612 = vrcp.pop %v611
        %v613 = vmul.f32 %v611, %v612
        %v614 = vsub.f32 1.0, %v613
        %v615 = vmul.f32 %v612, %v614
        %v616 = vadd.f32 %v612, %v615
        %vm617 = vweird.f32 %v611
        %vm618 = vweird.f32 %v612
        %vm619 = vmor %vm617, %vm618
        %v620 = vsel %vm619, %v612, %v616
        %v621 = vand.u32 2147483647, %v611
        %vm622 = vcmp.eq.f32.partialorder %v621, 8.507059e+37
        %v623 = vand.u32 %v611, 2147483648
        %v624 = vor.u32 1.1754944e-38, %v623
        %v625 = vsel %vm622, %v624, %v620
        %v626 = vmul.f32 1.0, %v625
        %628 = vrot.lane.b32.xlu0 %v605, 64
        %v629 = vpop.permute.xlu0 %628
        %v631 = vmul.f32 %v626, %v629
        %633 = vrot.lane.b32.xlu0 %v631, 64
        %v634 = vpop.permute.xlu0 %633
        %v636 = vadd.f32 %v581, %v634
        %v637 = vtanh.pop %v636
        %v638 = vsub.f32 1.0, %v626
        %640 = vrot.lane.b32.xlu0 %v637, 96
        %v641 = vpop.permute.xlu0 %640
        %v643 = vmul.f32 %v638, %v641
        %v644 = vmul.f32 %v626, %v580
        %v645 = vadd.f32 %v643, %v644
        %v646 = vld [vmem:[#allocation2 + $0x8] sm:$0x3]
        %648 = vrot.lane.b32.xlu0 %v645, 96
        %v649 = vpop.permute.xlu0 %648
        %v650 = vsel %vm347, %v649, 0
        %652 = vmatpush.msra.mxu0 0.0
        %653 = vmatpush.msra.mxu0 0.0
        %654 = vmatpush.msra.mxu0 0.0
        %655 = vmatpush.msra.mxu0 0.0
        %656 = vmatpush.msra.mxu0 0.0
        %657 = vmatpush.msra.mxu0 0.0
        %658 = vmatpush.msra.mxu0 0.0
        %659 = vmatpush.msra.mxu0 0.0
        %660 = vmatpush.msra.mxu0 0.0
        %661 = vmatpush.msra.mxu0 0.0
        %662 = vmatpush.msra.mxu0 0.0
        %663 = vmatpush.msra.mxu0 0.0
        %664 = vmatpush.msra.mxu0 %v383
        %665 = vmatpush.msra.mxu0 %v382
        %666 = vmatpush.msra.mxu0 %v381
        %667 = vmatpush.msra.mxu0 %v380
        %668 = vmatmul.f32.gmra.mxu0 %v650
        %v669 = vpop.f32.mrf.mxu0
        %v670 = vadd.f32 %v387, %v669
        %671 = vdwg.mxu0
        %v672 = vadd.f32 %v646, %v670
        %v673 = vxor.u32 %v672, 2147483648
        %v674 = vmul.f32 %v673, 1.442695
        %v675 = vpow.pop %v674
        %v676 = vadd.f32 %v675, 1.0
        %v677 = vrcp.pop %v676
        %v678 = vmul.f32 %v676, %v677
        %v679 = vsub.f32 1.0, %v678
        %v680 = vmul.f32 %v677, %v679
        %v681 = vadd.f32 %v677, %v680
        %vm682 = vweird.f32 %v676
        %vm683 = vweird.f32 %v677
        %vm684 = vmor %vm682, %vm683
        %v685 = vsel %vm684, %v677, %v681
        %v686 = vand.u32 2147483647, %v676
        %vm687 = vcmp.eq.f32.partialorder %v686, 8.507059e+37
        %v688 = vand.u32 %v676, 2147483648
        %v689 = vor.u32 1.1754944e-38, %v688
        %v690 = vsel %vm687, %v689, %v685
        %v691 = vmul.f32 1.0, %v690
        %693 = vrot.lane.b32.xlu0 %v670, 64
        %v694 = vpop.permute.xlu0 %693
        %v696 = vmul.f32 %v691, %v694
        %698 = vrot.lane.b32.xlu0 %v696, 64
        %v699 = vpop.permute.xlu0 %698
        %v701 = vadd.f32 %v646, %v699
        %v702 = vtanh.pop %v701
        %v703 = vsub.f32 1.0, %v691
        %705 = vrot.lane.b32.xlu0 %v702, 96
        %v706 = vpop.permute.xlu0 %705
        %v708 = vmul.f32 %v703, %v706
        %v709 = vmul.f32 %v691, %v645
        %v710 = vadd.f32 %v708, %v709
        %v711 = vld [vmem:[#allocation2 + $0xa] sm:$0x3]
        %713 = vrot.lane.b32.xlu0 %v710, 96
        %v714 = vpop.permute.xlu0 %713
        %v715 = vsel %vm347, %v714, 0
        %717 = vmatpush.msra.mxu0 0.0
        %718 = vmatpush.msra.mxu0 0.0
        %719 = vmatpush.msra.mxu0 0.0
        %720 = vmatpush.msra.mxu0 0.0
        %721 = vmatpush.msra.mxu0 0.0
        %722 = vmatpush.msra.mxu0 0.0
        %723 = vmatpush.msra.mxu0 0.0
        %724 = vmatpush.msra.mxu0 0.0
        %725 = vmatpush.msra.mxu0 0.0
        %726 = vmatpush.msra.mxu0 0.0
        %727 = vmatpush.msra.mxu0 0.0
        %728 = vmatpush.msra.mxu0 0.0
        %729 = vmatpush.msra.mxu0 %v383
        %730 = vmatpush.msra.mxu0 %v382
        %731 = vmatpush.msra.mxu0 %v381
        %732 = vmatpush.msra.mxu0 %v380
        %733 = vmatmul.f32.gmra.mxu0 %v715
        %v734 = vpop.f32.mrf.mxu0
        %v735 = vadd.f32 %v387, %v734
        %736 = vdwg.mxu0
        %v737 = vadd.f32 %v711, %v735
        %v738 = vxor.u32 %v737, 2147483648
        %v739 = vmul.f32 %v738, 1.442695
        %v740 = vpow.pop %v739
        %v741 = vadd.f32 %v740, 1.0
        %v742 = vrcp.pop %v741
        %v743 = vmul.f32 %v741, %v742
        %v744 = vsub.f32 1.0, %v743
        %v745 = vmul.f32 %v742, %v744
        %v746 = vadd.f32 %v742, %v745
        %vm747 = vweird.f32 %v741
        %vm748 = vweird.f32 %v742
        %vm749 = vmor %vm747, %vm748
        %v750 = vsel %vm749, %v742, %v746
        %v751 = vand.u32 2147483647, %v741
        %vm752 = vcmp.eq.f32.partialorder %v751, 8.507059e+37
        %v753 = vand.u32 %v741, 2147483648
        %v754 = vor.u32 1.1754944e-38, %v753
        %v755 = vsel %vm752, %v754, %v750
        %v756 = vmul.f32 1.0, %v755
        %758 = vrot.lane.b32.xlu0 %v735, 64
        %v759 = vpop.permute.xlu0 %758
        %v761 = vmul.f32 %v756, %v759
        %763 = vrot.lane.b32.xlu0 %v761, 64
        %v764 = vpop.permute.xlu0 %763
        %v766 = vadd.f32 %v711, %v764
        %v767 = vtanh.pop %v766
        %v768 = vsub.f32 1.0, %v756
        %770 = vrot.lane.b32.xlu0 %v767, 96
        %v771 = vpop.permute.xlu0 %770
        %v773 = vmul.f32 %v768, %v771
        %v774 = vmul.f32 %v756, %v710
        %v775 = vadd.f32 %v773, %v774
        %v776 = vld [vmem:[#allocation2 + $0xc] sm:$0x3]
        %778 = vrot.lane.b32.xlu0 %v775, 96
        %v779 = vpop.permute.xlu0 %778
        %v780 = vsel %vm347, %v779, 0
        %782 = vmatpush.msra.mxu0 0.0
        %783 = vmatpush.msra.mxu0 0.0
        %784 = vmatpush.msra.mxu0 0.0
        %785 = vmatpush.msra.mxu0 0.0
        %786 = vmatpush.msra.mxu0 0.0
        %787 = vmatpush.msra.mxu0 0.0
        %788 = vmatpush.msra.mxu0 0.0
        %789 = vmatpush.msra.mxu0 0.0
        %790 = vmatpush.msra.mxu0 0.0
        %791 = vmatpush.msra.mxu0 0.0
        %792 = vmatpush.msra.mxu0 0.0
        %793 = vmatpush.msra.mxu0 0.0
        %794 = vmatpush.msra.mxu0 %v383
        %795 = vmatpush.msra.mxu0 %v382
        %796 = vmatpush.msra.mxu0 %v381
        %797 = vmatpush.msra.mxu0 %v380
        %798 = vmatmul.f32.gmra.mxu0 %v780
        %v799 = vpop.f32.mrf.mxu0
        %v800 = vadd.f32 %v387, %v799
        %801 = vdwg.mxu0
        %v802 = vadd.f32 %v776, %v800
        %v803 = vxor.u32 %v802, 2147483648
        %v804 = vmul.f32 %v803, 1.442695
        %v805 = vpow.pop %v804
        %v806 = vadd.f32 %v805, 1.0
        %v807 = vrcp.pop %v806
        %v808 = vmul.f32 %v806, %v807
        %v809 = vsub.f32 1.0, %v808
        %v810 = vmul.f32 %v807, %v809
        %v811 = vadd.f32 %v807, %v810
        %vm812 = vweird.f32 %v806
        %vm813 = vweird.f32 %v807
        %vm814 = vmor %vm812, %vm813
        %v815 = vsel %vm814, %v807, %v811
        %v816 = vand.u32 2147483647, %v806
        %vm817 = vcmp.eq.f32.partialorder %v816, 8.507059e+37
        %v818 = vand.u32 %v806, 2147483648
        %v819 = vor.u32 1.1754944e-38, %v818
        %v820 = vsel %vm817, %v819, %v815
        %v821 = vmul.f32 1.0, %v820
        %823 = vrot.lane.b32.xlu0 %v800, 64
        %v824 = vpop.permute.xlu0 %823
        %v826 = vmul.f32 %v821, %v824
        %828 = vrot.lane.b32.xlu0 %v826, 64
        %v829 = vpop.permute.xlu0 %828
        %v831 = vadd.f32 %v776, %v829
        %v832 = vtanh.pop %v831
        %v833 = vsub.f32 1.0, %v821
        %835 = vrot.lane.b32.xlu0 %v832, 96
        %v836 = vpop.permute.xlu0 %835
        %v838 = vmul.f32 %v833, %v836
        %v839 = vmul.f32 %v821, %v775
        %v840 = vadd.f32 %v838, %v839
        %v841 = vld [vmem:[#allocation2 + $0xe] sm:$0x3]
        %843 = vrot.lane.b32.xlu0 %v840, 96
        %v844 = vpop.permute.xlu0 %843
        %v845 = vsel %vm347, %v844, 0
        %847 = vmatpush.msra.mxu0 0.0
        %848 = vmatpush.msra.mxu0 0.0
        %849 = vmatpush.msra.mxu0 0.0
        %850 = vmatpush.msra.mxu0 0.0
        %851 = vmatpush.msra.mxu0 0.0
        %852 = vmatpush.msra.mxu0 0.0
        %853 = vmatpush.msra.mxu0 0.0
        %854 = vmatpush.msra.mxu0 0.0
        %855 = vmatpush.msra.mxu0 0.0
        %856 = vmatpush.msra.mxu0 0.0
        %857 = vmatpush.msra.mxu0 0.0
        %858 = vmatpush.msra.mxu0 0.0
        %859 = vmatpush.msra.mxu0 %v383
        %860 = vmatpush.msra.mxu0 %v382
        %861 = vmatpush.msra.mxu0 %v381
        %862 = vmatpush.msra.mxu0 %v380
        %863 = vmatmul.f32.gmra.mxu0 %v845
        %v864 = vpop.f32.mrf.mxu0
        %v865 = vadd.f32 %v387, %v864
        %866 = vdwg.mxu0
        %v867 = vadd.f32 %v841, %v865
        %v868 = vxor.u32 %v867, 2147483648
        %v869 = vmul.f32 %v868, 1.442695
        %v870 = vpow.pop %v869
        %v871 = vadd.f32 %v870, 1.0
        %v872 = vrcp.pop %v871
        %v873 = vmul.f32 %v871, %v872
        %v874 = vsub.f32 1.0, %v873
        %v875 = vmul.f32 %v872, %v874
        %v876 = vadd.f32 %v872, %v875
        %vm877 = vweird.f32 %v871
        %vm878 = vweird.f32 %v872
        %vm879 = vmor %vm877, %vm878
        %v880 = vsel %vm879, %v872, %v876
        %v881 = vand.u32 2147483647, %v871
        %vm882 = vcmp.eq.f32.partialorder %v881, 8.507059e+37
        %v883 = vand.u32 %v871, 2147483648
        %v884 = vor.u32 1.1754944e-38, %v883
        %v885 = vsel %vm882, %v884, %v880
        %v886 = vmul.f32 1.0, %v885
        %888 = vrot.lane.b32.xlu0 %v865, 64
        %v889 = vpop.permute.xlu0 %888
        %v891 = vmul.f32 %v886, %v889
        %893 = vrot.lane.b32.xlu0 %v891, 64
        %v894 = vpop.permute.xlu0 %893
        %v896 = vadd.f32 %v841, %v894
        %v897 = vtanh.pop %v896
        %v898 = vsub.f32 1.0, %v886
        %900 = vrot.lane.b32.xlu0 %v897, 96
        %v901 = vpop.permute.xlu0 %900
        %v903 = vmul.f32 %v898, %v901
        %v904 = vmul.f32 %v886, %v840
        %v905 = vadd.f32 %v903, %v904
        %v906 = vrot.slane %v515, 6
        %v908 = vrot.slane %v580, 4
        %v910 = vrot.slane %v645, 2
        %v912 = vrot.slane %v775, 6
        %v914 = vrot.slane %v840, 4
        %v917 = vrot.slane %v905, 2
        %vm919 = vcmask 1041408
        %v920 = vsel %vm919, %v450, %v906
        %vm921 = vcmask 1043456
        %v922 = vsel %vm921, %v920, %v908
        %vm923 = vcmask 1045504
        %v924 = vsel %vm923, %v922, %v910
        %v925 = vsel %vm919, %v710, %v912
        %v926 = vsel %vm921, %v925, %v914
        %v927 = vsel %vm923, %v926, %v917
        %930 = vrot.lane.b32.xlu0 %v924, 96
        %v931 = vpop.permute.xlu0 %930
        %932 = vrot.lane.b32.xlu0 %v927, 96
        %v933 = vpop.permute.xlu0 %932
        %936 = vst.msk [vmem:[%s336] sm:$0xff] %vm347, %v931
        %937 = vst.msk [vmem:[%s336 + $0x8] sm:$0xff] %vm347, %v933
        %p938 = scmp.lt.s32.totalorder %s22, 1
        %s939 = scalar_select %p938, %s22, 1
        %s940 = smul.addr %s939, 2
        %s941 = smul.addr %s940, 8
        %s942 = scalar_lea.vmem %s5, %s941
        // Predicated region
        $region49: #{forward.2} parent=39 // pred_check
          %p943 = pneg %p170
        $region50: #{forward.2} parent=39 // pred_check_branch
          %945 = sbr.rel (%p943) target = $region52
        $region51: #{forward.2} parent=39 // pred_region
          _
        $region52: #{forward.2} parent=39 // pred_fallthru
          _
      $region40: #{forward.2} parent=5 // pred_fallthru
        _
      %p946 = scmp.le.s32.totalorder 2, %s17
      // Predicated region
      $region53: #{forward.2} parent=5 // pred_check
        %p947 = pneg %p946
      $region54: #{forward.2} parent=5 // pred_check_branch
        %949 = sbr.rel (%p947) target = $region56
      $region55: #{forward.2} parent=5 // pred_region
        %s950 = ssub.s32 %s17, 2
        // Predicated region
        $region57: #{forward.2} parent=55 // pred_check
          %p951 = pneg %p176
        $region58: #{forward.2} parent=55 // pred_check_branch
          %953 = sbr.rel (%p951) target = $region60
        $region59: #{forward.2} parent=55 // pred_region
          %p954 = scmp.lt.s32.totalorder %s23, 1
          %s955 = scalar_select %p954, %s23, 1
          %s956 = smul.addr %s955, 2
          %s957 = smul.addr %s956, 8
          %s958 = scalar_lea.vmem %s5, %s957
        $region60: #{forward.2} parent=55 // pred_fallthru
          _
      $region56: #{forward.2} parent=5 // pred_fallthru
        _
    $region6: #{forward.2} parent=1 // loop_footer
      %s21 = sadd.s32 1, %s17
    $region7: #{forward.2} parent=1 // loop_footer_branch
      %16 = sbr.rel target = $region3
    $region8: #{forward.2} parent=1 // loop_exit
      _
    %959 = vsyncpa [#allocation4], 1
    %s960 = scalar_lea.sflag [#allocation4], 1
    %961 = vsyncpa %s960, 1
    %962 = vsyncpa [#allocation6], 1
    %s963 = scalar_lea.sflag [#allocation6], 1
    %964 = vsyncpa %s963, 1

// kernel: forward.3
$region0: #{forward.3}
  #allocation0 [shape = 'u32[]', space=smem, size = 0x4, offset = 0x4, fixed_abs, tag = 'smem constant byte address 0x4 - core index']
  #allocation1 [shape = 'u32[72,128]{1,0:T(1,128)}', space=vmem, size = 0x9000, scoped, tag = 'internal scratch']
  #allocation2 [shape = 'f32[16,96]{1,0:T(8,128)}', space=vmem, size = 0x2000, scoped, tag = 'scratch operand']
  %s0 = inlined_call_operand.vmem [shape: f32[2,16,32], index: 0, kind: input, shape index: {}]
  %s1 = inlined_call_operand.hbm [shape: f32[2,32,96], index: 1, kind: input, shape index: {}]
  %s2 = inlined_call_operand.vmem [shape: f32[2,32,96], index: 2, kind: input, shape index: {}]
  %s3 = inlined_call_operand.vmem [shape: f32[2,1,96], index: 3, kind: input, shape index: {}]
  %s4 = inlined_call_operand.vmem [shape: f32[2,1,96], index: 4, kind: input, shape index: {}]
  %s5 = inlined_call_operand.vmem [shape: f32[2,16,32], index: 5, kind: output, shape index: {}]
  %s6 = sld [smem:[#allocation0]]
  $region57: #{forward.3} parent=0
    _
  %s8 = ssub.s32 1, %s6
  %s9 = scalar_select 0, %s8, %s6
  $region1: #{forward.3} parent=0
    #allocation3 [shape = 'u8[32768]{0}', space=vmem, size = 0x8000, scoped, tag = 'input window, operand 1']
    #allocation4 [shape = 's32[2]{0}', space=sflag, size = 0x8, scoped, tag = 'scoped memory for forward.3']
    %10 = vsyncpa [#allocation4], 0
    %s11 = scalar_lea.sflag [#allocation4], 1
    %12 = vsyncpa %s11, 0
    loop: start=0, step=1, limit=4
    $region2: #{forward.3} parent=1 // loop_pre_header
      _
    $region3: #{forward.3} parent=1 // loop_header
      %s14 = sphi 0, %s18
      %p15 = scmp.ge.s32.totalorder %s14, 4
      %s24 = sphi 0, %s26
      %s27 = sphi 0, %s24
      %s28 = sphi 0, %s27
      %s44 = sphi 0, %s28
      %s50 = sphi 0, %s52
      %s53 = sphi 0, %s50
      %s54 = sphi 0, %s53
      %s70 = sphi 0, %s54
      %s76 = sphi 0, %s78
      %s79 = sphi 0, %s76
      %s80 = sphi 0, %s79
      %s96 = sphi 0, %s80
      %s102 = sphi 0, %s104
      %s105 = sphi 0, %s102
      %s106 = sphi 0, %s105
      %s122 = sphi 0, %s106
      %s128 = sphi 0, %s130
      %s131 = sphi 0, %s128
      %s132 = sphi 0, %s131
      %s148 = sphi 0, %s132
      %s154 = sphi 0, %s156
      %s157 = sphi 0, %s154
      %s158 = sphi 0, %s157
      %s174 = sphi 0, %s158
    $region4: #{forward.3} parent=1 // loop_header_branch
      %17 = sbr.rel (%p15) target = $region8
    $region5: #{forward.3} parent=1 // loop_body
      %s19 = ssub.s32 %s14, 1
      %s20 = ssub.s32 %s14, 2
      %s21 = sadd.s32 %s14, 1
      %s22 = ssub.s32 %s14, %s21
      %p23 = scmp.eq.s32.totalorder %s22, 0
      %s25 = sadd.s32 %s24, 1
      %s26 = scalar_select %p23, %s24, %s25
      %p29 = pneg %p23
      %p30 = scmp.eq.s32.totalorder %s14, 1
      %p31 = por %p29, %p30
      %p32 = scmp.ne.s32.totalorder %s24, %s27
      %p33 = scmp.eq.s32.totalorder %s14, 0
      %p34 = por %p32, %p33
      %p35 = scmp.ne.s32.totalorder %s24, %s27
      %p36 = scmp.eq.s32.totalorder %s19, 1
      %p37 = por %p35, %p36
      %p38 = scmp.ne.s32.totalorder %s27, %s28
      %p39 = scmp.eq.s32.totalorder %s19, 0
      %p40 = por %p38, %p39
      %p41 = scmp.ne.s32.totalorder %s27, %s28
      %p42 = scmp.eq.s32.totalorder %s20, 1
      %p43 = por %p41, %p42
      %p45 = scmp.ne.s32.totalorder %s28, %s44
      %p46 = scmp.eq.s32.totalorder %s20, 0
      %p47 = por %p45, %p46
      %s48 = ssub.s32 %s14, %s21
      %p49 = scmp.eq.s32.totalorder %s48, 0
      %s51 = sadd.s32 %s50, 1
      %s52 = scalar_select %p49, %s50, %s51
      %p55 = pneg %p49
      %p56 = scmp.eq.s32.totalorder %s14, 1
      %p57 = por %p55, %p56
      %p58 = scmp.ne.s32.totalorder %s50, %s53
      %p59 = scmp.eq.s32.totalorder %s14, 0
      %p60 = por %p58, %p59
      %p61 = scmp.ne.s32.totalorder %s50, %s53
      %p62 = scmp.eq.s32.totalorder %s19, 1
      %p63 = por %p61, %p62
      %p64 = scmp.ne.s32.totalorder %s53, %s54
      %p65 = scmp.eq.s32.totalorder %s19, 0
      %p66 = por %p64, %p65
      %p67 = scmp.ne.s32.totalorder %s53, %s54
      %p68 = scmp.eq.s32.totalorder %s20, 1
      %p69 = por %p67, %p68
      %p71 = scmp.ne.s32.totalorder %s54, %s70
      %p72 = scmp.eq.s32.totalorder %s20, 0
      %p73 = por %p71, %p72
      %s74 = ssub.s32 %s14, %s21
      %p75 = scmp.eq.s32.totalorder %s74, 0
      %s77 = sadd.s32 %s76, 1
      %s78 = scalar_select %p75, %s76, %s77
      %p81 = pneg %p75
      %p82 = scmp.eq.s32.totalorder %s14, 1
      %p83 = por %p81, %p82
      %p84 = scmp.ne.s32.totalorder %s76, %s79
      %p85 = scmp.eq.s32.totalorder %s14, 0
      %p86 = por %p84, %p85
      %p87 = scmp.ne.s32.totalorder %s76, %s79
      %p88 = scmp.eq.s32.totalorder %s19, 1
      %p89 = por %p87, %p88
      %p90 = scmp.ne.s32.totalorder %s79, %s80
      %p91 = scmp.eq.s32.totalorder %s19, 0
      %p92 = por %p90, %p91
      %p93 = scmp.ne.s32.totalorder %s79, %s80
      %p94 = scmp.eq.s32.totalorder %s20, 1
      %p95 = por %p93, %p94
      %p97 = scmp.ne.s32.totalorder %s80, %s96
      %p98 = scmp.eq.s32.totalorder %s20, 0
      %p99 = por %p97, %p98
      %s100 = ssub.s32 %s14, %s21
      %p101 = scmp.eq.s32.totalorder %s100, 0
      %s103 = sadd.s32 %s102, 1
      %s104 = scalar_select %p101, %s102, %s103
      %p107 = pneg %p101
      %p108 = scmp.eq.s32.totalorder %s14, 1
      %p109 = por %p107, %p108
      %p110 = scmp.ne.s32.totalorder %s102, %s105
      %p111 = scmp.eq.s32.totalorder %s14, 0
      %p112 = por %p110, %p111
      %p113 = scmp.ne.s32.totalorder %s102, %s105
      %p114 = scmp.eq.s32.totalorder %s19, 1
      %p115 = por %p113, %p114
      %p116 = scmp.ne.s32.totalorder %s105, %s106
      %p117 = scmp.eq.s32.totalorder %s19, 0
      %p118 = por %p116, %p117
      %p119 = scmp.ne.s32.totalorder %s105, %s106
      %p120 = scmp.eq.s32.totalorder %s20, 1
      %p121 = por %p119, %p120
      %p123 = scmp.ne.s32.totalorder %s106, %s122
      %p124 = scmp.eq.s32.totalorder %s20, 0
      %p125 = por %p123, %p124
      %s126 = ssub.s32 %s14, %s21
      %p127 = scmp.eq.s32.totalorder %s126, 0
      %s129 = sadd.s32 %s128, 1
      %s130 = scalar_select %p127, %s128, %s129
      %p133 = pneg %p127
      %p134 = scmp.eq.s32.totalorder %s14, 1
      %p135 = por %p133, %p134
      %p136 = scmp.ne.s32.totalorder %s128, %s131
      %p137 = scmp.eq.s32.totalorder %s14, 0
      %p138 = por %p136, %p137
      %p139 = scmp.ne.s32.totalorder %s128, %s131
      %p140 = scmp.eq.s32.totalorder %s19, 1
      %p141 = por %p139, %p140
      %p142 = scmp.ne.s32.totalorder %s131, %s132
      %p143 = scmp.eq.s32.totalorder %s19, 0
      %p144 = por %p142, %p143
      %p145 = scmp.ne.s32.totalorder %s131, %s132
      %p146 = scmp.eq.s32.totalorder %s20, 1
      %p147 = por %p145, %p146
      %p149 = scmp.ne.s32.totalorder %s132, %s148
      %p150 = scmp.eq.s32.totalorder %s20, 0
      %p151 = por %p149, %p150
      %s152 = ssub.s32 %s14, %s21
      %p153 = scmp.eq.s32.totalorder %s152, 0
      %s155 = sadd.s32 %s154, 1
      %s156 = scalar_select %p153, %s154, %s155
      %p159 = pneg %p153
      %p160 = scmp.eq.s32.totalorder %s14, 1
      %p161 = por %p159, %p160
      %p162 = scmp.ne.s32.totalorder %s154, %s157
      %p163 = scmp.eq.s32.totalorder %s14, 0
      %p164 = por %p162, %p163
      %p165 = scmp.ne.s32.totalorder %s154, %s157
      %p166 = scmp.eq.s32.totalorder %s19, 1
      %p167 = por %p165, %p166
      %p168 = scmp.ne.s32.totalorder %s157, %s158
      %p169 = scmp.eq.s32.totalorder %s19, 0
      %p170 = por %p168, %p169
      %p171 = scmp.ne.s32.totalorder %s157, %s158
      %p172 = scmp.eq.s32.totalorder %s20, 1
      %p173 = por %p171, %p172
      %p175 = scmp.ne.s32.totalorder %s158, %s174
      %p176 = scmp.eq.s32.totalorder %s20, 0
      %p177 = por %p175, %p176
      %p178 = scmp.le.s32.totalorder 1, %s14
      %p179 = scmp.lt.s32.totalorder %s14, 3
      %p180 = pnand %p178, %p179
      %p181 = pneg %p180
      // Predicated region
      $region9: #{forward.3} parent=5 // pred_check
        _
      $region10: #{forward.3} parent=5 // pred_check_branch
        %183 = sbr.rel (%p180) target = $region12
      $region11: #{forward.3} parent=5 // pred_region
        %s184 = ssub.s32 %s14, 1
      $region12: #{forward.3} parent=5 // pred_fallthru
        _
      %p185 = scmp.lt.s32.totalorder %s14, 2
      // Predicated region
      $region13: #{forward.3} parent=5 // pred_check
        %p186 = pneg %p185
      $region14: #{forward.3} parent=5 // pred_check_branch
        %188 = sbr.rel (%p186) target = $region16
      $region15: #{forward.3} parent=5 // pred_region
        // Predicated region
        $region17: #{forward.3} parent=15 // pred_check
          %p189 = pneg %p34
        $region18: #{forward.3} parent=15 // pred_check_branch
          %191 = sbr.rel (%p189) target = $region20
        $region19: #{forward.3} parent=15 // pred_region
          %p192 = scmp.lt.s32.totalorder %s14, 1
          %s193 = scalar_select %p192, %s14, 1
          %s194 = smul.addr %s193, 2
          %s195 = smul.addr %s194, 8
          %s196 = scalar_lea.vmem %s0, %s195
        $region20: #{forward.3} parent=15 // pred_fallthru
          _
        // Predicated region
        $region21: #{forward.3} parent=15 // pred_check
          %p197 = pneg %p60
        $region22: #{forward.3} parent=15 // pred_check_branch
          %199 = sbr.rel (%p197) target = $region24
        $region23: #{forward.3} parent=15 // pred_region
          %s200 = sand.u32 %s50, 1
          %s201 = scalar_lea.sflag [#allocation4], %s200
          %s202 = sand.u32 %s50, 1
          %s203 = smul.addr %s202, 32
          %s204 = scalar_lea.vmem [#allocation3], %s203
          %206 = vsyncadd %s201, 0
          %s207 = smul.addr %s14, 4
          %s208 = smul.addr %s207, 8
          %s209 = scalar_lea.hbm %s1, %s208
          %s210 = sshll.u32 %s209, 4
          %s211 = int_to_ptr.hbm [resolvable:$true] %s210
          %s212 = sshll.u32 %s204, 4
          %s213 = int_to_ptr.vmem [resolvable:$true] %s212
          %218 = dma.hbm_to_vmem [thread:$0]  %s211, 512, %s213, %s201, 128, 128, 8
        $region24: #{forward.3} parent=15 // pred_fallthru
          _
        // Predicated region
        $region25: #{forward.3} parent=15 // pred_check
          %p219 = pneg %p86
        $region26: #{forward.3} parent=15 // pred_check_branch
          %221 = sbr.rel (%p219) target = $region28
        $region27: #{forward.3} parent=15 // pred_region
          %p222 = scmp.lt.s32.totalorder %s14, 1
          %s223 = scalar_select %p222, %s14, 1
          %s224 = smul.addr %s223, 4
          %s225 = smul.addr %s224, 8
          %s226 = scalar_lea.vmem %s2, %s225
        $region28: #{forward.3} parent=15 // pred_fallthru
          _
        // Predicated region
        $region29: #{forward.3} parent=15 // pred_check
          %p227 = pneg %p112
        $region30: #{forward.3} parent=15 // pred_check_branch
          %229 = sbr.rel (%p227) target = $region32
        $region31: #{forward.3} parent=15 // pred_region
          %p230 = scmp.lt.s32.totalorder %s14, 1
          %s231 = scalar_select %p230, %s14, 1
          %s232 = scalar_lea.vmem %s3, %s231
        $region32: #{forward.3} parent=15 // pred_fallthru
          _
        // Predicated region
        $region33: #{forward.3} parent=15 // pred_check
          %p233 = pneg %p138
        $region34: #{forward.3} parent=15 // pred_check_branch
          %235 = sbr.rel (%p233) target = $region36
        $region35: #{forward.3} parent=15 // pred_region
          %p236 = scmp.lt.s32.totalorder %s14, 1
          %s237 = scalar_select %p236, %s14, 1
          %s238 = scalar_lea.vmem %s4, %s237
        $region36: #{forward.3} parent=15 // pred_fallthru
          _
      $region16: #{forward.3} parent=5 // pred_fallthru
        _
      %p239 = scmp.le.s32.totalorder 1, %s14
      %p240 = scmp.lt.s32.totalorder %s14, 3
      %p241 = pnand %p239, %p240
      %p242 = pneg %p241
      // Predicated region
      $region37: #{forward.3} parent=5 // pred_check
        _
      $region38: #{forward.3} parent=5 // pred_check_branch
        %244 = sbr.rel (%p241) target = $region40
      $region39: #{forward.3} parent=5 // pred_region
        %s245 = ssub.s32 %s14, 1
        %s246 = sand.u32 %s53, 1
        %s247 = scalar_lea.sflag [#allocation4], %s246
        %s248 = sand.u32 %s53, 1
        %s249 = smul.addr %s248, 32
        %s250 = scalar_lea.vmem [#allocation3], %s249
        // Predicated region
        $region41: #{forward.3} parent=39 // pred_check
          %p251 = pneg %p66
        $region42: #{forward.3} parent=39 // pred_check_branch
          %253 = sbr.rel (%p251) target = $region44
        $region43: #{forward.3} parent=39 // pred_region
          %255 = dma.done %s247, 512
        $region44: #{forward.3} parent=39 // pred_fallthru
          _
        %p256 = scmp.lt.s32.totalorder %s19, 1
        %s257 = scalar_select %p256, %s19, 1
        %s258 = smul.addr %s257, 2
        %s259 = smul.addr %s258, 8
        %s260 = scalar_lea.vmem %s0, %s259
        %p261 = pneg %p40
        %p262 = pneg %p37
        %s263 = sand.u32 %s53, 1
        %s264 = scalar_lea.sflag [#allocation4], %s263
        %s265 = sand.u32 %s53, 1
        %s266 = smul.addr %s265, 32
        %s267 = scalar_lea.vmem [#allocation3], %s266
        %p268 = pneg %p66
        %p269 = pneg %p63
        %p270 = scmp.lt.s32.totalorder %s19, 1
        %s271 = scalar_select %p270, %s19, 1
        %s272 = smul.addr %s271, 4
        %s273 = smul.addr %s272, 8
        %s274 = scalar_lea.vmem %s2, %s273
        %p275 = pneg %p92
        %p276 = pneg %p89
        %p277 = scmp.lt.s32.totalorder %s19, 1
        %s278 = scalar_select %p277, %s19, 1
        %s279 = scalar_lea.vmem %s3, %s278
        %p280 = pneg %p118
        %p281 = pneg %p115
        %p282 = scmp.lt.s32.totalorder %s19, 1
        %s283 = scalar_select %p282, %s19, 1
        %s284 = scalar_lea.vmem %s4, %s283
        %p285 = pneg %p144
        %p286 = pneg %p141
        %p287 = pneg %p170
        %p288 = pneg %p167
        %p289 = scmp.lt.s32.totalorder %s19, 1
        %s290 = scalar_select %p289, %s19, 1
        %s291 = smul.addr %s290, 2
        %s292 = smul.addr %s291, 8
        %s293 = scalar_lea.vmem %s5, %s292
        %p294 = scmp.lt.s32.totalorder %s19, 1
        %s295 = scalar_select %p294, %s19, 1
        %s296 = smul.addr %s295, 2
        %s297 = smul.addr %s296, 8
        %s298 = scalar_lea.vmem %s0, %s297
        %p299 = scmp.lt.s32.totalorder %s19, 1
        %s300 = scalar_select %p299, %s19, 1
        %s301 = smul.addr %s300, 4
        %s302 = smul.addr %s301, 8
        %s303 = scalar_lea.vmem %s2, %s302
        %p304 = scmp.lt.s32.totalorder %s19, 1
        %s305 = scalar_select %p304, %s19, 1
        %s306 = scalar_lea.vmem %s3, %s305
        %p307 = scmp.lt.s32.totalorder %s19, 1
        %s308 = scalar_select %p307, %s19, 1
        %s309 = scalar_lea.vmem %s4, %s308
        %p310 = scmp.lt.s32.totalorder %s19, 1
        %s311 = scalar_select %p310, %s19, 1
        %s312 = smul.addr %s311, 2
        %s313 = smul.addr %s312, 8
        %s314 = scalar_lea.vmem %s5, %s313
        %v315 = vld [vmem:[%s298] sm:$0xff]
        %v316 = vld [vmem:[%s298 + $0x8] sm:$0xff]
        %v317 = vld [vmem:[%s250] sm:$0xff]
        %v318 = vld [vmem:[%s250 + $0x8] sm:$0xff]
        %v319 = vld [vmem:[%s250 + $0x10] sm:$0xff]
        %v320 = vld [vmem:[%s250 + $0x18] sm:$0xff]
        %v321 = vld [vmem:[%s306] sm:$0x1]
        %v323 = vperm.slane %v321, 0
        %vm325 = vcmask 261120
        %v327 = vsel %vm325, %v315, 0
        %v330 = vsel %vm325, %v316, 0
        %332 = vmatpush.msra.mxu0 0.0
        %333 = vmatpush.msra.mxu0 0.0
        %334 = vmatpush.msra.mxu0 0.0
        %335 = vmatpush.msra.mxu0 0.0
        %336 = vmatpush.msra.mxu0 0.0
        %337 = vmatpush.msra.mxu0 0.0
        %338 = vmatpush.msra.mxu0 0.0
        %339 = vmatpush.msra.mxu0 0.0
        %340 = vmatpush.msra.mxu0 0.0
        %341 = vmatpush.msra.mxu0 0.0
        %342 = vmatpush.msra.mxu0 0.0
        %343 = vmatpush.msra.mxu0 0.0
        %344 = vmatpush.msra.mxu0 %v320
        %345 = vmatpush.msra.mxu0 %v319
        %346 = vmatpush.msra.mxu0 %v318
        %347 = vmatpush.msra.mxu0 %v317
        %348 = vmatmul.f32.gmra.mxu0 %v327
        %v349 = vpop.f32.mrf.mxu0
        %v350 = vadd.f32 %v323, %v349
        %351 = vmatmul.f32.gmra.mxu0 %v330
        %v352 = vpop.f32.mrf.mxu0
        %v353 = vadd.f32 %v323, %v352
        %354 = vdwg.mxu0
        %vm355 = vcmask 785408
        %356 = vst.msk [vmem:[#allocation2] sm:$0xff] %vm355, %v350
        %357 = vst.msk [vmem:[#allocation2 + $0x8] sm:$0xff] %vm355, %v353
        %v358 = vld [vmem:[%s303] sm:$0xff]
        %v359 = vld [vmem:[%s303 + $0x8] sm:$0xff]
        %v360 = vld [vmem:[%s303 + $0x10] sm:$0xff]
        %v361 = vld [vmem:[%s303 + $0x18] sm:$0xff]
        %v362 = vld [vmem:[%s309] sm:$0x1]
        %v363 = vld [vmem:[#allocation2] sm:$0x3]
        %v365 = vperm.slane %v362, 0
        %v368 = vsel %vm325, 0.0, 0
        %370 = vmatpush.msra.mxu0 0.0
        %371 = vmatpush.msra.mxu0 0.0
        %372 = vmatpush.msra.mxu0 0.0
        %373 = vmatpush.msra.mxu0 0.0
        %374 = vmatpush.msra.mxu0 0.0
        %375 = vmatpush.msra.mxu0 0.0
        %376 = vmatpush.msra.mxu0 0.0
        %377 = vmatpush.msra.mxu0 0.0
        %378 = vmatpush.msra.mxu0 0.0
        %379 = vmatpush.msra.mxu0 0.0
        %380 = vmatpush.msra.mxu0 0.0
        %381 = vmatpush.msra.mxu0 0.0
        %382 = vmatpush.msra.mxu0 %v361
        %383 = vmatpush.msra.mxu0 %v360
        %384 = vmatpush.msra.mxu0 %v359
        %385 = vmatpush.msra.mxu0 %v358
        %386 = vmatmul.f32.gmra.mxu0 %v368
        %v387 = vpop.f32.mrf.mxu0
        %v388 = vadd.f32 %v365, %v387
        %389 = vdwg.mxu0
        %v390 = vadd.f32 %v363, %v388
        %v391 = vxor.u32 %v390, 2147483648
        %v392 = vmul.f32 %v391, 1.442695
        %v393 = vpow.pop %v392
        %v394 = vadd.f32 %v393, 1.0
        %v395 = vrcp.pop %v394
        %v396 = vmul.f32 %v394, %v395
        %v397 = vsub.f32 1.0, %v396
        %v398 = vmul.f32 %v395, %v397
        %v399 = vadd.f32 %v395, %v398
        %vm400 = vweird.f32 %v394
        %vm401 = vweird.f32 %v395
        %vm402 = vmor %vm400, %vm401
        %v403 = vsel %vm402, %v395, %v399
        %v404 = vand.u32 2147483647, %v394
        %vm405 = vcmp.eq.f32.partialorder %v404, 8.507059e+37
        %v406 = vand.u32 %v394, 2147483648
        %v407 = vor.u32 1.1754944e-38, %v406
        %v408 = vsel %vm405, %v407, %v403
        %v409 = vmul.f32 1.0, %v408
        %411 = vrot.lane.b32.xlu0 %v388, 64
        %v412 = vpop.permute.xlu0 %411
        %v414 = vmul.f32 %v409, %v412
        %416 = vrot.lane.b32.xlu0 %v414, 64
        %v417 = vpop.permute.xlu0 %416
        %v419 = vadd.f32 %v363, %v417
        %v420 = vtanh.pop %v419
        %v421 = vsub.f32 1.0, %v409
        %423 = vrot.lane.b32.xlu0 %v420, 96
        %v424 = vpop.permute.xlu0 %423
        %v426 = vmul.f32 %v421, %v424
        %v427 = vmul.f32 %v409, 0.0
        %v428 = vadd.f32 %v426, %v427
        %v429 = vld [vmem:[#allocation2 + $0x2] sm:$0x3]
        %431 = vrot.lane.b32.xlu0 %v428, 96
        %v432 = vpop.permute.xlu0 %431
        %v433 = vsel %vm325, %v432, 0
        %435 = vmatpush.msra.mxu0 0.0
        %436 = vmatpush.msra.mxu0 0.0
        %437 = vmatpush.msra.mxu0 0.0
        %438 = vmatpush.msra.mxu0 0.0
        %439 = vmatpush.msra.mxu0 0.0
        %440 = vmatpush.msra.mxu0 0.0
        %441 = vmatpush.msra.mxu0 0.0
        %442 = vmatpush.msra.mxu0 0.0
        %443 = vmatpush.msra.mxu0 0.0
        %444 = vmatpush.msra.mxu0 0.0
        %445 = vmatpush.msra.mxu0 0.0
        %446 = vmatpush.msra.mxu0 0.0
        %447 = vmatpush.msra.mxu0 %v361
        %448 = vmatpush.msra.mxu0 %v360
        %449 = vmatpush.msra.mxu0 %v359
        %450 = vmatpush.msra.mxu0 %v358
        %451 = vmatmul.f32.gmra.mxu0 %v433
        %v452 = vpop.f32.mrf.mxu0
        %v453 = vadd.f32 %v365, %v452
        %454 = vdwg.mxu0
        %v455 = vadd.f32 %v429, %v453
        %v456 = vxor.u32 %v455, 2147483648
        %v457 = vmul.f32 %v456, 1.442695
        %v458 = vpow.pop %v457
        %v459 = vadd.f32 %v458, 1.0
        %v460 = vrcp.pop %v459
        %v461 = vmul.f32 %v459, %v460
        %v462 = vsub.f32 1.0, %v461
        %v463 = vmul.f32 %v460, %v462
        %v464 = vadd.f32 %v460, %v463
        %vm465 = vweird.f32 %v459
        %vm466 = vweird.f32 %v460
        %vm467 = vmor %vm465, %vm466
        %v468 = vsel %vm467, %v460, %v464
        %v469 = vand.u32 2147483647, %v459
        %vm470 = vcmp.eq.f32.partialorder %v469, 8.507059e+37
        %v471 = vand.u32 %v459, 2147483648
        %v472 = vor.u32 1.1754944e-38, %v471
        %v473 = vsel %vm470, %v472, %v468
        %v474 = vmul.f32 1.0, %v473
        %476 = vrot.lane.b32.xlu0 %v453, 64
        %v477 = vpop.permute.xlu0 %476
        %v479 = vmul.f32 %v474, %v477
        %481 = vrot.lane.b32.xlu0 %v479, 64
        %v482 = vpop.permute.xlu0 %481
        %v484 = vadd.f32 %v429, %v482
        %v485 = vtanh.pop %v484
        %v486 = vsub.f32 1.0, %v474
        %488 = vrot.lane.b32.xlu0 %v485, 96
        %v489 = vpop.permute.xlu0 %488
        %v491 = vmul.f32 %v486, %v489
        %v492 = vmul.f32 %v474, %v428
        %v493 = vadd.f32 %v491, %v492
        %v494 = vld [vmem:[#allocation2 + $0x4] sm:$0x3]
        %496 = vrot.lane.b32.xlu0 %v493, 96
        %v497 = vpop.permute.xlu0 %496
        %v498 = vsel %vm325, %v497, 0
        %500 = vmatpush.msra.mxu0 0.0
        %501 = vmatpush.msra.mxu0 0.0
        %502 = vmatpush.msra.mxu0 0.0
        %503 = vmatpush.msra.mxu0 0.0
        %504 = vmatpush.msra.mxu0 0.0
        %505 = vmatpush.msra.mxu0 0.0
        %506 = vmatpush.msra.mxu0 0.0
        %507 = vmatpush.msra.mxu0 0.0
        %508 = vmatpush.msra.mxu0 0.0
        %509 = vmatpush.msra.mxu0 0.0
        %510 = vmatpush.msra.mxu0 0.0
        %511 = vmatpush.msra.mxu0 0.0
        %512 = vmatpush.msra.mxu0 %v361
        %513 = vmatpush.msra.mxu0 %v360
        %514 = vmatpush.msra.mxu0 %v359
        %515 = vmatpush.msra.mxu0 %v358
        %516 = vmatmul.f32.gmra.mxu0 %v498
        %v517 = vpop.f32.mrf.mxu0
        %v518 = vadd.f32 %v365, %v517
        %519 = vdwg.mxu0
        %v520 = vadd.f32 %v494, %v518
        %v521 = vxor.u32 %v520, 2147483648
        %v522 = vmul.f32 %v521, 1.442695
        %v523 = vpow.pop %v522
        %v524 = vadd.f32 %v523, 1.0
        %v525 = vrcp.pop %v524
        %v526 = vmul.f32 %v524, %v525
        %v527 = vsub.f32 1.0, %v526
        %v528 = vmul.f32 %v525, %v527
        %v529 = vadd.f32 %v525, %v528
        %vm530 = vweird.f32 %v524
        %vm531 = vweird.f32 %v525
        %vm532 = vmor %vm530, %vm531
        %v533 = vsel %vm532, %v525, %v529
        %v534 = vand.u32 2147483647, %v524
        %vm535 = vcmp.eq.f32.partialorder %v534, 8.507059e+37
        %v536 = vand.u32 %v524, 2147483648
        %v537 = vor.u32 1.1754944e-38, %v536
        %v538 = vsel %vm535, %v537, %v533
        %v539 = vmul.f32 1.0, %v538
        %541 = vrot.lane.b32.xlu0 %v518, 64
        %v542 = vpop.permute.xlu0 %541
        %v544 = vmul.f32 %v539, %v542
        %546 = vrot.lane.b32.xlu0 %v544, 64
        %v547 = vpop.permute.xlu0 %546
        %v549 = vadd.f32 %v494, %v547
        %v550 = vtanh.pop %v549
        %v551 = vsub.f32 1.0, %v539
        %553 = vrot.lane.b32.xlu0 %v550, 96
        %v554 = vpop.permute.xlu0 %553
        %v556 = vmul.f32 %v551, %v554
        %v557 = vmul.f32 %v539, %v493
        %v558 = vadd.f32 %v556, %v557
        %v559 = vld [vmem:[#allocation2 + $0x6] sm:$0x3]
        %561 = vrot.lane.b32.xlu0 %v558, 96
        %v562 = vpop.permute.xlu0 %561
        %v563 = vsel %vm325, %v562, 0
        %565 = vmatpush.msra.mxu0 0.0
        %566 = vmatpush.msra.mxu0 0.0
        %567 = vmatpush.msra.mxu0 0.0
        %568 = vmatpush.msra.mxu0 0.0
        %569 = vmatpush.msra.mxu0 0.0
        %570 = vmatpush.msra.mxu0 0.0
        %571 = vmatpush.msra.mxu0 0.0
        %572 = vmatpush.msra.mxu0 0.0
        %573 = vmatpush.msra.mxu0 0.0
        %574 = vmatpush.msra.mxu0 0.0
        %575 = vmatpush.msra.mxu0 0.0
        %576 = vmatpush.msra.mxu0 0.0
        %577 = vmatpush.msra.mxu0 %v361
        %578 = vmatpush.msra.mxu0 %v360
        %579 = vmatpush.msra.mxu0 %v359
        %580 = vmatpush.msra.mxu0 %v358
        %581 = vmatmul.f32.gmra.mxu0 %v563
        %v582 = vpop.f32.mrf.mxu0
        %v583 = vadd.f32 %v365, %v582
        %584 = vdwg.mxu0
        %v585 = vadd.f32 %v559, %v583
        %v586 = vxor.u32 %v585, 2147483648
        %v587 = vmul.f32 %v586, 1.442695
        %v588 = vpow.pop %v587
        %v589 = vadd.f32 %v588, 1.0
        %v590 = vrcp.pop %v589
        %v591 = vmul.f32 %v589, %v590
        %v592 = vsub.f32 1.0, %v591
        %v593 = vmul.f32 %v590, %v592
        %v594 = vadd.f32 %v590, %v593
        %vm595 = vweird.f32 %v589
        %vm596 = vweird.f32 %v590
        %vm597 = vmor %vm595, %vm596
        %v598 = vsel %vm597, %v590, %v594
        %v599 = vand.u32 2147483647, %v589
        %vm600 = vcmp.eq.f32.partialorder %v599, 8.507059e+37
        %v601 = vand.u32 %v589, 2147483648
        %v602 = vor.u32 1.1754944e-38, %v601
        %v603 = vsel %vm600, %v602, %v598
        %v604 = vmul.f32 1.0, %v603
        %606 = vrot.lane.b32.xlu0 %v583, 64
        %v607 = vpop.permute.xlu0 %606
        %v609 = vmul.f32 %v604, %v607
        %611 = vrot.lane.b32.xlu0 %v609, 64
        %v612 = vpop.permute.xlu0 %611
        %v614 = vadd.f32 %v559, %v612
        %v615 = vtanh.pop %v614
        %v616 = vsub.f32 1.0, %v604
        %618 = vrot.lane.b32.xlu0 %v615, 96
        %v619 = vpop.permute.xlu0 %618
        %v621 = vmul.f32 %v616, %v619
        %v622 = vmul.f32 %v604, %v558
        %v623 = vadd.f32 %v621, %v622
        %v624 = vld [vmem:[#allocation2 + $0x8] sm:$0x3]
        %626 = vrot.lane.b32.xlu0 %v623, 96
        %v627 = vpop.permute.xlu0 %626
        %v628 = vsel %vm325, %v627, 0
        %630 = vmatpush.msra.mxu0 0.0
        %631 = vmatpush.msra.mxu0 0.0
        %632 = vmatpush.msra.mxu0 0.0
        %633 = vmatpush.msra.mxu0 0.0
        %634 = vmatpush.msra.mxu0 0.0
        %635 = vmatpush.msra.mxu0 0.0
        %636 = vmatpush.msra.mxu0 0.0
        %637 = vmatpush.msra.mxu0 0.0
        %638 = vmatpush.msra.mxu0 0.0
        %639 = vmatpush.msra.mxu0 0.0
        %640 = vmatpush.msra.mxu0 0.0
        %641 = vmatpush.msra.mxu0 0.0
        %642 = vmatpush.msra.mxu0 %v361
        %643 = vmatpush.msra.mxu0 %v360
        %644 = vmatpush.msra.mxu0 %v359
        %645 = vmatpush.msra.mxu0 %v358
        %646 = vmatmul.f32.gmra.mxu0 %v628
        %v647 = vpop.f32.mrf.mxu0
        %v648 = vadd.f32 %v365, %v647
        %649 = vdwg.mxu0
        %v650 = vadd.f32 %v624, %v648
        %v651 = vxor.u32 %v650, 2147483648
        %v652 = vmul.f32 %v651, 1.442695
        %v653 = vpow.pop %v652
        %v654 = vadd.f32 %v653, 1.0
        %v655 = vrcp.pop %v654
        %v656 = vmul.f32 %v654, %v655
        %v657 = vsub.f32 1.0, %v656
        %v658 = vmul.f32 %v655, %v657
        %v659 = vadd.f32 %v655, %v658
        %vm660 = vweird.f32 %v654
        %vm661 = vweird.f32 %v655
        %vm662 = vmor %vm660, %vm661
        %v663 = vsel %vm662, %v655, %v659
        %v664 = vand.u32 2147483647, %v654
        %vm665 = vcmp.eq.f32.partialorder %v664, 8.507059e+37
        %v666 = vand.u32 %v654, 2147483648
        %v667 = vor.u32 1.1754944e-38, %v666
        %v668 = vsel %vm665, %v667, %v663
        %v669 = vmul.f32 1.0, %v668
        %671 = vrot.lane.b32.xlu0 %v648, 64
        %v672 = vpop.permute.xlu0 %671
        %v674 = vmul.f32 %v669, %v672
        %676 = vrot.lane.b32.xlu0 %v674, 64
        %v677 = vpop.permute.xlu0 %676
        %v679 = vadd.f32 %v624, %v677
        %v680 = vtanh.pop %v679
        %v681 = vsub.f32 1.0, %v669
        %683 = vrot.lane.b32.xlu0 %v680, 96
        %v684 = vpop.permute.xlu0 %683
        %v686 = vmul.f32 %v681, %v684
        %v687 = vmul.f32 %v669, %v623
        %v688 = vadd.f32 %v686, %v687
        %v689 = vld [vmem:[#allocation2 + $0xa] sm:$0x3]
        %691 = vrot.lane.b32.xlu0 %v688, 96
        %v692 = vpop.permute.xlu0 %691
        %v693 = vsel %vm325, %v692, 0
        %695 = vmatpush.msra.mxu0 0.0
        %696 = vmatpush.msra.mxu0 0.0
        %697 = vmatpush.msra.mxu0 0.0
        %698 = vmatpush.msra.mxu0 0.0
        %699 = vmatpush.msra.mxu0 0.0
        %700 = vmatpush.msra.mxu0 0.0
        %701 = vmatpush.msra.mxu0 0.0
        %702 = vmatpush.msra.mxu0 0.0
        %703 = vmatpush.msra.mxu0 0.0
        %704 = vmatpush.msra.mxu0 0.0
        %705 = vmatpush.msra.mxu0 0.0
        %706 = vmatpush.msra.mxu0 0.0
        %707 = vmatpush.msra.mxu0 %v361
        %708 = vmatpush.msra.mxu0 %v360
        %709 = vmatpush.msra.mxu0 %v359
        %710 = vmatpush.msra.mxu0 %v358
        %711 = vmatmul.f32.gmra.mxu0 %v693
        %v712 = vpop.f32.mrf.mxu0
        %v713 = vadd.f32 %v365, %v712
        %714 = vdwg.mxu0
        %v715 = vadd.f32 %v689, %v713
        %v716 = vxor.u32 %v715, 2147483648
        %v717 = vmul.f32 %v716, 1.442695
        %v718 = vpow.pop %v717
        %v719 = vadd.f32 %v718, 1.0
        %v720 = vrcp.pop %v719
        %v721 = vmul.f32 %v719, %v720
        %v722 = vsub.f32 1.0, %v721
        %v723 = vmul.f32 %v720, %v722
        %v724 = vadd.f32 %v720, %v723
        %vm725 = vweird.f32 %v719
        %vm726 = vweird.f32 %v720
        %vm727 = vmor %vm725, %vm726
        %v728 = vsel %vm727, %v720, %v724
        %v729 = vand.u32 2147483647, %v719
        %vm730 = vcmp.eq.f32.partialorder %v729, 8.507059e+37
        %v731 = vand.u32 %v719, 2147483648
        %v732 = vor.u32 1.1754944e-38, %v731
        %v733 = vsel %vm730, %v732, %v728
        %v734 = vmul.f32 1.0, %v733
        %736 = vrot.lane.b32.xlu0 %v713, 64
        %v737 = vpop.permute.xlu0 %736
        %v739 = vmul.f32 %v734, %v737
        %741 = vrot.lane.b32.xlu0 %v739, 64
        %v742 = vpop.permute.xlu0 %741
        %v744 = vadd.f32 %v689, %v742
        %v745 = vtanh.pop %v744
        %v746 = vsub.f32 1.0, %v734
        %748 = vrot.lane.b32.xlu0 %v745, 96
        %v749 = vpop.permute.xlu0 %748
        %v751 = vmul.f32 %v746, %v749
        %v752 = vmul.f32 %v734, %v688
        %v753 = vadd.f32 %v751, %v752
        %v754 = vld [vmem:[#allocation2 + $0xc] sm:$0x3]
        %756 = vrot.lane.b32.xlu0 %v753, 96
        %v757 = vpop.permute.xlu0 %756
        %v758 = vsel %vm325, %v757, 0
        %760 = vmatpush.msra.mxu0 0.0
        %761 = vmatpush.msra.mxu0 0.0
        %762 = vmatpush.msra.mxu0 0.0
        %763 = vmatpush.msra.mxu0 0.0
        %764 = vmatpush.msra.mxu0 0.0
        %765 = vmatpush.msra.mxu0 0.0
        %766 = vmatpush.msra.mxu0 0.0
        %767 = vmatpush.msra.mxu0 0.0
        %768 = vmatpush.msra.mxu0 0.0
        %769 = vmatpush.msra.mxu0 0.0
        %770 = vmatpush.msra.mxu0 0.0
        %771 = vmatpush.msra.mxu0 0.0
        %772 = vmatpush.msra.mxu0 %v361
        %773 = vmatpush.msra.mxu0 %v360
        %774 = vmatpush.msra.mxu0 %v359
        %775 = vmatpush.msra.mxu0 %v358
        %776 = vmatmul.f32.gmra.mxu0 %v758
        %v777 = vpop.f32.mrf.mxu0
        %v778 = vadd.f32 %v365, %v777
        %779 = vdwg.mxu0
        %v780 = vadd.f32 %v754, %v778
        %v781 = vxor.u32 %v780, 2147483648
        %v782 = vmul.f32 %v781, 1.442695
        %v783 = vpow.pop %v782
        %v784 = vadd.f32 %v783, 1.0
        %v785 = vrcp.pop %v784
        %v786 = vmul.f32 %v784, %v785
        %v787 = vsub.f32 1.0, %v786
        %v788 = vmul.f32 %v785, %v787
        %v789 = vadd.f32 %v785, %v788
        %vm790 = vweird.f32 %v784
        %vm791 = vweird.f32 %v785
        %vm792 = vmor %vm790, %vm791
        %v793 = vsel %vm792, %v785, %v789
        %v794 = vand.u32 2147483647, %v784
        %vm795 = vcmp.eq.f32.partialorder %v794, 8.507059e+37
        %v796 = vand.u32 %v784, 2147483648
        %v797 = vor.u32 1.1754944e-38, %v796
        %v798 = vsel %vm795, %v797, %v793
        %v799 = vmul.f32 1.0, %v798
        %801 = vrot.lane.b32.xlu0 %v778, 64
        %v802 = vpop.permute.xlu0 %801
        %v804 = vmul.f32 %v799, %v802
        %806 = vrot.lane.b32.xlu0 %v804, 64
        %v807 = vpop.permute.xlu0 %806
        %v809 = vadd.f32 %v754, %v807
        %v810 = vtanh.pop %v809
        %v811 = vsub.f32 1.0, %v799
        %813 = vrot.lane.b32.xlu0 %v810, 96
        %v814 = vpop.permute.xlu0 %813
        %v816 = vmul.f32 %v811, %v814
        %v817 = vmul.f32 %v799, %v753
        %v818 = vadd.f32 %v816, %v817
        %v819 = vld [vmem:[#allocation2 + $0xe] sm:$0x3]
        %821 = vrot.lane.b32.xlu0 %v818, 96
        %v822 = vpop.permute.xlu0 %821
        %v823 = vsel %vm325, %v822, 0
        %825 = vmatpush.msra.mxu0 0.0
        %826 = vmatpush.msra.mxu0 0.0
        %827 = vmatpush.msra.mxu0 0.0
        %828 = vmatpush.msra.mxu0 0.0
        %829 = vmatpush.msra.mxu0 0.0
        %830 = vmatpush.msra.mxu0 0.0
        %831 = vmatpush.msra.mxu0 0.0
        %832 = vmatpush.msra.mxu0 0.0
        %833 = vmatpush.msra.mxu0 0.0
        %834 = vmatpush.msra.mxu0 0.0
        %835 = vmatpush.msra.mxu0 0.0
        %836 = vmatpush.msra.mxu0 0.0
        %837 = vmatpush.msra.mxu0 %v361
        %838 = vmatpush.msra.mxu0 %v360
        %839 = vmatpush.msra.mxu0 %v359
        %840 = vmatpush.msra.mxu0 %v358
        %841 = vmatmul.f32.gmra.mxu0 %v823
        %v842 = vpop.f32.mrf.mxu0
        %v843 = vadd.f32 %v365, %v842
        %844 = vdwg.mxu0
        %v845 = vadd.f32 %v819, %v843
        %v846 = vxor.u32 %v845, 2147483648
        %v847 = vmul.f32 %v846, 1.442695
        %v848 = vpow.pop %v847
        %v849 = vadd.f32 %v848, 1.0
        %v850 = vrcp.pop %v849
        %v851 = vmul.f32 %v849, %v850
        %v852 = vsub.f32 1.0, %v851
        %v853 = vmul.f32 %v850, %v852
        %v854 = vadd.f32 %v850, %v853
        %vm855 = vweird.f32 %v849
        %vm856 = vweird.f32 %v850
        %vm857 = vmor %vm855, %vm856
        %v858 = vsel %vm857, %v850, %v854
        %v859 = vand.u32 2147483647, %v849
        %vm860 = vcmp.eq.f32.partialorder %v859, 8.507059e+37
        %v861 = vand.u32 %v849, 2147483648
        %v862 = vor.u32 1.1754944e-38, %v861
        %v863 = vsel %vm860, %v862, %v858
        %v864 = vmul.f32 1.0, %v863
        %866 = vrot.lane.b32.xlu0 %v843, 64
        %v867 = vpop.permute.xlu0 %866
        %v869 = vmul.f32 %v864, %v867
        %871 = vrot.lane.b32.xlu0 %v869, 64
        %v872 = vpop.permute.xlu0 %871
        %v874 = vadd.f32 %v819, %v872
        %v875 = vtanh.pop %v874
        %v876 = vsub.f32 1.0, %v864
        %878 = vrot.lane.b32.xlu0 %v875, 96
        %v879 = vpop.permute.xlu0 %878
        %v881 = vmul.f32 %v876, %v879
        %v882 = vmul.f32 %v864, %v818
        %v883 = vadd.f32 %v881, %v882
        %v884 = vrot.slane %v493, 6
        %v886 = vrot.slane %v558, 4
        %v888 = vrot.slane %v623, 2
        %v890 = vrot.slane %v753, 6
        %v892 = vrot.slane %v818, 4
        %v895 = vrot.slane %v883, 2
        %vm897 = vcmask 1041408
        %v898 = vsel %vm897, %v428, %v884
        %vm899 = vcmask 1043456
        %v900 = vsel %vm899, %v898, %v886
        %vm901 = vcmask 1045504
        %v902 = vsel %vm901, %v900, %v888
        %v903 = vsel %vm897, %v688, %v890
        %v904 = vsel %vm899, %v903, %v892
        %v905 = vsel %vm901, %v904, %v895
        %908 = vrot.lane.b32.xlu0 %v902, 96
        %v909 = vpop.permute.xlu0 %908
        %910 = vrot.lane.b32.xlu0 %v905, 96
        %v911 = vpop.permute.xlu0 %910
        %914 = vst.msk [vmem:[%s314] sm:$0xff] %vm325, %v909
        %915 = vst.msk [vmem:[%s314 + $0x8] sm:$0xff] %vm325, %v911
        %p916 = scmp.lt.s32.totalorder %s19, 1
        %s917 = scalar_select %p916, %s19, 1
        %s918 = smul.addr %s917, 2
        %s919 = smul.addr %s918, 8
        %s920 = scalar_lea.vmem %s5, %s919
        // Predicated region
        $region45: #{forward.3} parent=39 // pred_check
          %p921 = pneg %p167
        $region46: #{forward.3} parent=39 // pred_check_branch
          %923 = sbr.rel (%p921) target = $region48
        $region47: #{forward.3} parent=39 // pred_region
          _
        $region48: #{forward.3} parent=39 // pred_fallthru
          _
      $region40: #{forward.3} parent=5 // pred_fallthru
        _
      %p924 = scmp.le.s32.totalorder 2, %s14
      // Predicated region
      $region49: #{forward.3} parent=5 // pred_check
        %p925 = pneg %p924
      $region50: #{forward.3} parent=5 // pred_check_branch
        %927 = sbr.rel (%p925) target = $region52
      $region51: #{forward.3} parent=5 // pred_region
        %s928 = ssub.s32 %s14, 2
        // Predicated region
        $region53: #{forward.3} parent=51 // pred_check
          %p929 = pneg %p173
        $region54: #{forward.3} parent=51 // pred_check_branch
          %931 = sbr.rel (%p929) target = $region56
        $region55: #{forward.3} parent=51 // pred_region
          %p932 = scmp.lt.s32.totalorder %s20, 1
          %s933 = scalar_select %p932, %s20, 1
          %s934 = smul.addr %s933, 2
          %s935 = smul.addr %s934, 8
          %s936 = scalar_lea.vmem %s5, %s935
        $region56: #{forward.3} parent=51 // pred_fallthru
          _
      $region52: #{forward.3} parent=5 // pred_fallthru
        _
    $region6: #{forward.3} parent=1 // loop_footer
      %s18 = sadd.s32 1, %s14
    $region7: #{forward.3} parent=1 // loop_footer_branch
      %13 = sbr.rel target = $region3
    $region8: #{forward.3} parent=1 // loop_exit
      _
    %937 = vsyncpa [#allocation4], 1
    %s938 = scalar_lea.sflag [#allocation4], 1
    %939 = vsyncpa %s938, 1

</llo_original>
